<compile_context>
chip_gen: v6e
topology: v6e:2x2x1
jax: 0.10.0
libtpu: 0.0.40
codegen_flags: <defaults>
</compile_context>

<pallas_src>
import functools

import jax
import jax.numpy as jnp
from jax import lax
from jax.experimental import pallas as pl
from jax.experimental.pallas import tpu as pltpu

_EPS = 1e-5
_PACK = 16  # bf16 packed sublane tile: (16, 128); gates the im2col fusion


def _make_kernel(Cin, Cout, stride, has_shortcut, Ho, Wo):
    """Fused residual-block kernel for one sample (one grid step)."""
    Wp = Wo + 2              # compute-grid row width (2 halo columns per row)
    L = Ho * Wp              # pixels per compute grid
    Lx = L + 3 * Wp          # zero-extended grid for the intermediate (slack)

    fuse1 = (Cin % _PACK) == 0    # conv1 K=9*Cin im2col matmul
    fuse2 = (Cout % _PACK) == 0   # conv2 K=9*Cout im2col matmul

    if stride == 1:
        def tap_src(dy, dx):
            return 0, dy * Wp + dx
        sc_src = (0, Wp + 1)             # 1x1 (or identity) reads x[y, x]
        G = 1
    else:                                # stride == 2: parity sub-grids
        def tap_src(dy, dx):
            return (dy % 2) * 2 + (dx % 2), (dy // 2) * Wp + (dx // 2)
        sc_src = (3, 0)                  # odd/odd parity grid = x[2y, 2x]
        G = 4

    # identity-shortcut blocks keep x in f32 so the residual add is exact;
    # projection-shortcut blocks take a bf16 x stream (half the HBM bytes).
    x_is_bf16 = has_shortcut

    def kernel(*refs):
        if has_shortcut:
            (x_ref, w1_ref, s1_ref, b1_ref, w2_ref, s2_ref, b2_ref, m_ref,
             ws_ref, ss_ref, bs_ref, o_ref, h1s_ref) = refs
        else:
            (x_ref, w1_ref, s1_ref, b1_ref, w2_ref, s2_ref, b2_ref, m_ref,
             o_ref, h1s_ref) = refs

        # Load each (parity) sub-grid once.
        xg = [x_ref[g] for g in range(G)]
        xg_bf = xg if x_is_bf16 else [v.astype(jnp.bfloat16) for v in xg]

        # ---- conv1: 9 taps as constant lane-offset slices ----
        taps1 = []
        for dy in range(3):
            for dx in range(3):
                g, start = tap_src(dy, dx)
                taps1.append(xg_bf[g][:, start:start + L])    # (Cin, L) bf16
        if fuse1:
            k1 = jnp.concatenate(taps1, axis=0)               # (9*Cin, L)
            acc1 = jnp.dot(w1_ref[...], k1,
                           preferred_element_type=jnp.float32)
        else:
            acc1 = None
            for t, tap in enumerate(taps1):
                d = jnp.dot(w1_ref[:, t * Cin:(t + 1) * Cin], tap,
                            preferred_element_type=jnp.float32)
                acc1 = d if acc1 is None else acc1 + d

        # bn1 + relu (f32); zero the 2 halo columns per row so conv2 sees the
        # correct zero padding.
        h1 = jnp.maximum(acc1 * s1_ref[...] + b1_ref[...], 0.0) * m_ref[...]

        # ---- place h1 on its own zero-padded flat grid (bf16 VMEM scratch).
        #      Only the small margins are re-zeroed each grid step; the
        #      interior is fully overwritten (parallel-grid safe). ----
        h1s_ref[:, 0:Wp + 1] = jnp.zeros((Cout, Wp + 1), jnp.bfloat16)
        h1s_ref[:, Wp + 1 + L:Lx] = jnp.zeros((Cout, 2 * Wp - 1), jnp.bfloat16)
        h1s_ref[:, Wp + 1:Wp + 1 + L] = h1.astype(jnp.bfloat16)
        h1e = h1s_ref[...]                                    # (Cout, Lx) bf16

        # ---- conv2 (3x3, stride 1, pad 1) on the padded h1 grid ----
        taps2 = [h1e[:, dy * Wp + dx:dy * Wp + dx + L]
                 for dy in range(3) for dx in range(3)]       # (Cout, L) bf16
        if fuse2:
            k2 = jnp.concatenate(taps2, axis=0)               # (9*Cout, L)
            acc2 = jnp.dot(w2_ref[...], k2,
                           preferred_element_type=jnp.float32)
        else:
            acc2 = None
            for t, tap in enumerate(taps2):
                d = jnp.dot(w2_ref[:, t * Cout:(t + 1) * Cout], tap,
                            preferred_element_type=jnp.float32)
                acc2 = d if acc2 is None else acc2 + d
        h2 = acc2 * s2_ref[...] + b2_ref[...]                 # bn2, f32

        # ---- shortcut ----
        g, start = sc_src
        if has_shortcut:
            sc = jnp.dot(ws_ref[...], xg_bf[g][:, start:start + L],
                         preferred_element_type=jnp.float32)
            sc = sc * ss_ref[...] + bs_ref[...]
        else:
            sc = xg[g][:, start:start + L]                    # identity, exact f32

        # ---- single lane-dense store of the padded (Cout, L) tile; the halo
        #      columns are cropped in the wrapper (cheap XLA slice). ----
        o_ref[...] = jnp.maximum(h2 + sc, 0.0)

    return kernel, G, Wp, L, Lx, x_is_bf16


def _conv_w_to_mat(w_oihw):
    """OIHW (Cout, Cin, 3, 3) -> (Cout, 9*Cin) bf16; column = (3*dy+dx)*Cin+cin."""
    O, I, KH, KW = w_oihw.shape
    return (jnp.transpose(w_oihw, (0, 2, 3, 1))
            .reshape(O, KH * KW * I).astype(jnp.bfloat16))


def _bn_fold(gamma, beta, mean, var, eps=_EPS):
    scale = gamma / jnp.sqrt(var + eps)
    bias = beta - mean * scale
    return (scale.reshape(-1, 1).astype(jnp.float32),
            bias.reshape(-1, 1).astype(jnp.float32))


@functools.partial(jax.jit, static_argnames=("stride",))
def residual_block(x_nchw, params, stride=1):
    """Forward pass of ResidualBlock.  x_nchw: (N, Cin, H, W) float32, NCHW."""
    assert stride in (1, 2), "ResNet-18 basic block uses stride 1 or 2"
    N, Cin, H, W = x_nchw.shape
    Cout = params["w1"].shape[0]
    has_shortcut = (stride != 1) or (Cin != Cout)

    Ho = (H - 1) // stride + 1
    Wo = (W - 1) // stride + 1
    kernel, G, Wp, L, Lx, x_is_bf16 = _make_kernel(
        Cin, Cout, stride, has_shortcut, Ho, Wo)
    Hp = Ho + 3
    Npix = Hp * Wp

    x = x_nchw.astype(jnp.bfloat16 if x_is_bf16 else jnp.float32)
    if stride == 1:
        xp = jnp.pad(x, ((0, 0), (0, 0), (1, 2), (1, 1)))     # (N,Cin,Hp,Wp)
        x_stack = xp.reshape(N, Cin, Npix)[:, None]           # (N,1,Cin,Npix)
    else:
        # 4 parity sub-grids so the kernel never does strided slicing.
        xp = jnp.pad(x, ((0, 0), (0, 0), (1, 6), (1, 4)))
        subs = []
        for a in (0, 1):
            for b in (0, 1):
                s = xp[:, :, a::2, b::2][:, :, :Hp, :Wp]
                subs.append(s.reshape(N, Cin, Npix))
        x_stack = jnp.stack(subs, axis=1)                     # (N,4,Cin,Npix)

    # halo-column mask for the intermediate activation (1 at real pixels)
    mask = (jnp.arange(L) % Wp < Wo).astype(jnp.float32).reshape(1, L)

    w1 = _conv_w_to_mat(params["w1"])
    s1, b1 = _bn_fold(*params["bn1"])
    w2 = _conv_w_to_mat(params["w2"])
    s2, b2 = _bn_fold(*params["bn2"])

    inputs = [x_stack, w1, s1, b1, w2, s2, b2, mask]
    in_specs = [
        pl.BlockSpec((None, G, Cin, Npix), lambda n: (n, 0, 0, 0)),
        pl.BlockSpec((Cout, 9 * Cin), lambda n: (0, 0)),
        pl.BlockSpec((Cout, 1), lambda n: (0, 0)),
        pl.BlockSpec((Cout, 1), lambda n: (0, 0)),
        pl.BlockSpec((Cout, 9 * Cout), lambda n: (0, 0)),
        pl.BlockSpec((Cout, 1), lambda n: (0, 0)),
        pl.BlockSpec((Cout, 1), lambda n: (0, 0)),
        pl.BlockSpec((1, L), lambda n: (0, 0)),
    ]
    if has_shortcut:
        ws = params["ws"][:, :, 0, 0].astype(jnp.bfloat16)    # (Cout, Cin)
        ss, bs = _bn_fold(*params["bns"])
        inputs += [ws, ss, bs]
        in_specs += [
            pl.BlockSpec((Cout, Cin), lambda n: (0, 0)),
            pl.BlockSpec((Cout, 1), lambda n: (0, 0)),
            pl.BlockSpec((Cout, 1), lambda n: (0, 0)),
        ]

    out_pad = pl.pallas_call(
        kernel,
        out_shape=jax.ShapeDtypeStruct((N, Cout, L), jnp.float32),
        grid_spec=pltpu.PrefetchScalarGridSpec(
            num_scalar_prefetch=0,
            grid=(N,),
            in_specs=in_specs,
            out_specs=pl.BlockSpec((None, Cout, L), lambda n: (n, 0, 0)),
            scratch_shapes=[pltpu.VMEM((Cout, Lx), jnp.bfloat16)],
        ),
        compiler_params=pltpu.CompilerParams(
            dimension_semantics=("parallel",)),
    )(*inputs)

    # Drop the 2 halo columns per row outside the kernel (single dense kernel
    # store + one cheap XLA slice) and return NCHW.
    return out_pad.reshape(N, Cout, Ho, Wp)[:, :, :, :Wo]


# ---------------- pure-JAX reference (for correctness check) ----------------
def ref_block(x, params, stride, eps=_EPS):
    def conv(x, w, s, pad):
        return lax.conv_general_dilated(
            x, w, window_strides=(s, s), padding=pad,
            dimension_numbers=("NCHW", "OIHW", "NCHW"),
            precision=lax.Precision.HIGHEST)

    def bn(x, p):
        gamma, beta, mean, var = p
        inv = gamma / jnp.sqrt(var + eps)
        return (x - mean[None, :, None, None]) * inv[None, :, None, None] \
            + beta[None, :, None, None]

    out = jax.nn.relu(bn(conv(x, params["w1"], stride, [(1, 1), (1, 1)]),
                         params["bn1"]))
    out = bn(conv(out, params["w2"], 1, [(1, 1), (1, 1)]), params["bn2"])
    if stride != 1 or x.shape[1] != params["w1"].shape[0]:
        sc = bn(conv(x, params["ws"], stride, [(0, 0), (0, 0)]), params["bns"])
    else:
        sc = x
    return jax.nn.relu(out + sc)


def make_params(key, cin, cout, has_shortcut):
    kk = jax.random.split(key, 12)
    p = {
        "w1": 0.2 * jax.random.normal(kk[0], (cout, cin, 3, 3), jnp.float32),
        "bn1": (1.0 + 0.1 * jax.random.normal(kk[1], (cout,), jnp.float32),
                0.1 * jax.random.normal(kk[2], (cout,), jnp.float32),
                0.1 * jax.random.normal(kk[3], (cout,), jnp.float32),
                0.5 + jax.random.uniform(kk[4], (cout,), jnp.float32)),
        "w2": 0.2 * jax.random.normal(kk[5], (cout, cout, 3, 3), jnp.float32),
        "bn2": (1.0 + 0.1 * jax.random.normal(kk[6], (cout,), jnp.float32),
                0.1 * jax.random.normal(kk[7], (cout,), jnp.float32),
                0.1 * jax.random.normal(kk[8], (cout,), jnp.float32),
                0.5 + jax.random.uniform(kk[9], (cout,), jnp.float32)),
    }
    if has_shortcut:
        p["ws"] = 0.2 * jax.random.normal(kk[10], (cout, cin, 1, 1), jnp.float32)
        p["bns"] = (jnp.ones((cout,), jnp.float32),
                    jnp.zeros((cout,), jnp.float32),
                    0.1 * jax.random.normal(kk[11], (cout,), jnp.float32),
                    jnp.ones((cout,), jnp.float32))
    return p


def _check(y, r, name):
    # bf16 MXU inputs vs a Precision.HIGHEST f32 reference -> loosened tol
    # (intentional, inference-mode kernel).
    ok = bool(jnp.allclose(y, r, atol=1e-1, rtol=1e-1))
    err = float(jnp.max(jnp.abs(y - r)))
    assert ok, f"{name} mismatch: max abs err = {err}"


if __name__ == "__main__":
    key = jax.random.PRNGKey(0)
    ks = jax.random.split(key, 6)

    N, Cin, H, W = 2, 4, 16, 16
    x = jax.random.normal(ks[0], (N, Cin, H, W), jnp.float32)

    # Case 1: in_planes != planes, stride=1 -> 1x1-conv + BN shortcut branch
    planes = 8
    p1 = make_params(ks[1], Cin, planes, has_shortcut=True)
    y1 = jax.block_until_ready(residual_block(x, p1, stride=1))
    r1 = ref_block(x, p1, stride=1)
    assert y1.shape == (N, planes, H, W)
    _check(y1, r1, "case1")

    # Case 2: in_planes == planes, stride=1 -> identity shortcut (f32 x path)
    p2 = make_params(ks[2], Cin, Cin, has_shortcut=False)
    y2 = jax.block_until_ready(residual_block(x, p2, stride=1))
    r2 = ref_block(x, p2, stride=1)
    assert y2.shape == (N, Cin, H, W)
    _check(y2, r2, "case2")

    # Case 3: stride=2 downsampling block (strided conv1 + strided 1x1 shortcut)
    p3 = make_params(ks[3], Cin, planes, has_shortcut=True)
    y3 = jax.block_until_ready(residual_block(x, p3, stride=2))
    r3 = ref_block(x, p3, stride=2)
    assert y3.shape == (N, planes, H // 2, W // 2)
    _check(y3, r3, "case3")

    # Case 4: channel count a multiple of the bf16 sublane pack ->
    #         exercises the fused single K=9*C im2col matmul path.
    C4, H4, W4 = 16, 8, 8
    x4 = jax.random.normal(ks[4], (N, C4, H4, W4), jnp.float32)
    p4 = make_params(ks[5], C4, C4, has_shortcut=False)
    y4 = jax.block_until_ready(residual_block(x4, p4, stride=1))
    r4 = ref_block(x4, p4, stride=1)
    assert y4.shape == (N, C4, H4, W4)
    _check(y4, r4, "case4")

    print("KERNEL_OK")
</pallas_src>

<mosaic_0001>
module attributes {stable_mosaic.version = 11 : i64} {
  func.func @kernel(%arg0: i32, %arg1: memref<1x1x4x342xbf16, #tpu.memory_space<vmem>>, %arg2: memref<8x36xbf16, #tpu.memory_space<vmem>>, %arg3: memref<8x1xf32, #tpu.memory_space<vmem>>, %arg4: memref<8x1xf32, #tpu.memory_space<vmem>>, %arg5: memref<8x72xbf16, #tpu.memory_space<vmem>>, %arg6: memref<8x1xf32, #tpu.memory_space<vmem>>, %arg7: memref<8x1xf32, #tpu.memory_space<vmem>>, %arg8: memref<1x288xf32, #tpu.memory_space<vmem>>, %arg9: memref<8x4xbf16, #tpu.memory_space<vmem>>, %arg10: memref<8x1xf32, #tpu.memory_space<vmem>>, %arg11: memref<8x1xf32, #tpu.memory_space<vmem>>, %arg12: memref<1x8x288xf32, #tpu.memory_space<vmem>>, %arg13: memref<8x342xbf16, #tpu.memory_space<vmem>>) attributes {dimension_semantics = [#tpu.dimension_semantics<parallel>], iteration_bounds = array<i64: 2>, scalar_prefetch = 0 : i64, scratch_operands = 1 : i64, tpu.core_type = #tpu.core_type<tc>, window_params = [{transform_indices = @transform_0, window_bounds = array<i64: 1, 1, 4, 342>}, {pipeline_mode = #tpu.pipeline_mode<synchronous>, transform_indices = @transform_1, window_bounds = array<i64: 8, 36>}, {pipeline_mode = #tpu.pipeline_mode<synchronous>, transform_indices = @transform_2, window_bounds = array<i64: 8, 1>}, {pipeline_mode = #tpu.pipeline_mode<synchronous>, transform_indices = @transform_3, window_bounds = array<i64: 8, 1>}, {pipeline_mode = #tpu.pipeline_mode<synchronous>, transform_indices = @transform_4, window_bounds = array<i64: 8, 72>}, {pipeline_mode = #tpu.pipeline_mode<synchronous>, transform_indices = @transform_5, window_bounds = array<i64: 8, 1>}, {pipeline_mode = #tpu.pipeline_mode<synchronous>, transform_indices = @transform_6, window_bounds = array<i64: 8, 1>}, {pipeline_mode = #tpu.pipeline_mode<synchronous>, transform_indices = @transform_7, window_bounds = array<i64: 1, 288>}, {pipeline_mode = #tpu.pipeline_mode<synchronous>, transform_indices = @transform_8, window_bounds = array<i64: 8, 4>}, {pipeline_mode = #tpu.pipeline_mode<synchronous>, transform_indices = @transform_9, window_bounds = array<i64: 8, 1>}, {pipeline_mode = #tpu.pipeline_mode<synchronous>, transform_indices = @transform_10, window_bounds = array<i64: 8, 1>}, {transform_indices = @transform_11, window_bounds = array<i64: 1, 8, 288>}]} {
    %c0 = arith.constant 0 : index
    %c0_0 = arith.constant 0 : index
    %c0_1 = arith.constant 0 : index
    %c0_2 = arith.constant 0 : index
    %0 = vector.load %arg1[%c0, %c0_0, %c0_1, %c0_2] : memref<1x1x4x342xbf16, #tpu.memory_space<vmem>>, vector<1x1x4x342xbf16>
    %1 = vector.shape_cast %0 : vector<1x1x4x342xbf16> to vector<4x342xbf16>
    %2 = vector.extract_strided_slice %1 {offsets = [0, 0], sizes = [4, 288], strides = [1, 1]} : vector<4x342xbf16> to vector<4x288xbf16>
    %3 = vector.extract_strided_slice %1 {offsets = [0, 1], sizes = [4, 288], strides = [1, 1]} : vector<4x342xbf16> to vector<4x288xbf16>
    %4 = vector.extract_strided_slice %1 {offsets = [0, 2], sizes = [4, 288], strides = [1, 1]} : vector<4x342xbf16> to vector<4x288xbf16>
    %5 = vector.extract_strided_slice %1 {offsets = [0, 18], sizes = [4, 288], strides = [1, 1]} : vector<4x342xbf16> to vector<4x288xbf16>
    %6 = vector.extract_strided_slice %1 {offsets = [0, 19], sizes = [4, 288], strides = [1, 1]} : vector<4x342xbf16> to vector<4x288xbf16>
    %7 = vector.extract_strided_slice %1 {offsets = [0, 20], sizes = [4, 288], strides = [1, 1]} : vector<4x342xbf16> to vector<4x288xbf16>
    %8 = vector.extract_strided_slice %1 {offsets = [0, 36], sizes = [4, 288], strides = [1, 1]} : vector<4x342xbf16> to vector<4x288xbf16>
    %9 = vector.extract_strided_slice %1 {offsets = [0, 37], sizes = [4, 288], strides = [1, 1]} : vector<4x342xbf16> to vector<4x288xbf16>
    %10 = vector.extract_strided_slice %1 {offsets = [0, 38], sizes = [4, 288], strides = [1, 1]} : vector<4x342xbf16> to vector<4x288xbf16>
    %c0_3 = arith.constant 0 : index
    %c0_4 = arith.constant 0 : index
    %11 = vector.load %arg2[%c0_3, %c0_4] : memref<8x36xbf16, #tpu.memory_space<vmem>>, vector<8x4xbf16>
    %cst = arith.constant dense<0.000000e+00> : vector<8x288xf32>
    %12 = tpu.matmul %11, %2, %cst {dimension_numbers = #tpu.dot_dimension_numbers<[1], [0], [0], [1], [0, 0, 1, 1], [], []>} : vector<8x4xbf16>, vector<4x288xbf16>, vector<8x288xf32> -> vector<8x288xf32>
    %c0_5 = arith.constant 0 : index
    %c4 = arith.constant 4 : index
    %13 = vector.load %arg2[%c0_5, %c4] : memref<8x36xbf16, #tpu.memory_space<vmem>>, vector<8x4xbf16>
    %cst_6 = arith.constant dense<0.000000e+00> : vector<8x288xf32>
    %14 = tpu.matmul %13, %3, %cst_6 {dimension_numbers = #tpu.dot_dimension_numbers<[1], [0], [0], [1], [0, 0, 1, 1], [], []>} : vector<8x4xbf16>, vector<4x288xbf16>, vector<8x288xf32> -> vector<8x288xf32>
    %15 = arith.addf %12, %14 : vector<8x288xf32>
    %c0_7 = arith.constant 0 : index
    %c8 = arith.constant 8 : index
    %16 = vector.load %arg2[%c0_7, %c8] : memref<8x36xbf16, #tpu.memory_space<vmem>>, vector<8x4xbf16>
    %cst_8 = arith.constant dense<0.000000e+00> : vector<8x288xf32>
    %17 = tpu.matmul %16, %4, %cst_8 {dimension_numbers = #tpu.dot_dimension_numbers<[1], [0], [0], [1], [0, 0, 1, 1], [], []>} : vector<8x4xbf16>, vector<4x288xbf16>, vector<8x288xf32> -> vector<8x288xf32>
    %18 = arith.addf %15, %17 : vector<8x288xf32>
    %c0_9 = arith.constant 0 : index
    %c12 = arith.constant 12 : index
    %19 = vector.load %arg2[%c0_9, %c12] : memref<8x36xbf16, #tpu.memory_space<vmem>>, vector<8x4xbf16>
    %cst_10 = arith.constant dense<0.000000e+00> : vector<8x288xf32>
    %20 = tpu.matmul %19, %5, %cst_10 {dimension_numbers = #tpu.dot_dimension_numbers<[1], [0], [0], [1], [0, 0, 1, 1], [], []>} : vector<8x4xbf16>, vector<4x288xbf16>, vector<8x288xf32> -> vector<8x288xf32>
    %21 = arith.addf %18, %20 : vector<8x288xf32>
    %c0_11 = arith.constant 0 : index
    %c16 = arith.constant 16 : index
    %22 = vector.load %arg2[%c0_11, %c16] : memref<8x36xbf16, #tpu.memory_space<vmem>>, vector<8x4xbf16>
    %cst_12 = arith.constant dense<0.000000e+00> : vector<8x288xf32>
    %23 = tpu.matmul %22, %6, %cst_12 {dimension_numbers = #tpu.dot_dimension_numbers<[1], [0], [0], [1], [0, 0, 1, 1], [], []>} : vector<8x4xbf16>, vector<4x288xbf16>, vector<8x288xf32> -> vector<8x288xf32>
    %24 = arith.addf %21, %23 : vector<8x288xf32>
    %c0_13 = arith.constant 0 : index
    %c20 = arith.constant 20 : index
    %25 = vector.load %arg2[%c0_13, %c20] : memref<8x36xbf16, #tpu.memory_space<vmem>>, vector<8x4xbf16>
    %cst_14 = arith.constant dense<0.000000e+00> : vector<8x288xf32>
    %26 = tpu.matmul %25, %7, %cst_14 {dimension_numbers = #tpu.dot_dimension_numbers<[1], [0], [0], [1], [0, 0, 1, 1], [], []>} : vector<8x4xbf16>, vector<4x288xbf16>, vector<8x288xf32> -> vector<8x288xf32>
    %27 = arith.addf %24, %26 : vector<8x288xf32>
    %c0_15 = arith.constant 0 : index
    %c24 = arith.constant 24 : index
    %28 = vector.load %arg2[%c0_15, %c24] : memref<8x36xbf16, #tpu.memory_space<vmem>>, vector<8x4xbf16>
    %cst_16 = arith.constant dense<0.000000e+00> : vector<8x288xf32>
    %29 = tpu.matmul %28, %8, %cst_16 {dimension_numbers = #tpu.dot_dimension_numbers<[1], [0], [0], [1], [0, 0, 1, 1], [], []>} : vector<8x4xbf16>, vector<4x288xbf16>, vector<8x288xf32> -> vector<8x288xf32>
    %30 = arith.addf %27, %29 : vector<8x288xf32>
    %c0_17 = arith.constant 0 : index
    %c28 = arith.constant 28 : index
    %31 = vector.load %arg2[%c0_17, %c28] : memref<8x36xbf16, #tpu.memory_space<vmem>>, vector<8x4xbf16>
    %cst_18 = arith.constant dense<0.000000e+00> : vector<8x288xf32>
    %32 = tpu.matmul %31, %9, %cst_18 {dimension_numbers = #tpu.dot_dimension_numbers<[1], [0], [0], [1], [0, 0, 1, 1], [], []>} : vector<8x4xbf16>, vector<4x288xbf16>, vector<8x288xf32> -> vector<8x288xf32>
    %33 = arith.addf %30, %32 : vector<8x288xf32>
    %c0_19 = arith.constant 0 : index
    %c32 = arith.constant 32 : index
    %34 = vector.load %arg2[%c0_19, %c32] : memref<8x36xbf16, #tpu.memory_space<vmem>>, vector<8x4xbf16>
    %cst_20 = arith.constant dense<0.000000e+00> : vector<8x288xf32>
    %35 = tpu.matmul %34, %10, %cst_20 {dimension_numbers = #tpu.dot_dimension_numbers<[1], [0], [0], [1], [0, 0, 1, 1], [], []>} : vector<8x4xbf16>, vector<4x288xbf16>, vector<8x288xf32> -> vector<8x288xf32>
    %36 = arith.addf %33, %35 : vector<8x288xf32>
    %c0_21 = arith.constant 0 : index
    %c0_22 = arith.constant 0 : index
    %37 = vector.load %arg3[%c0_21, %c0_22] : memref<8x1xf32, #tpu.memory_space<vmem>>, vector<8x1xf32>
    %38 = vector.broadcast %37 : vector<8x1xf32> to vector<8x288xf32>
    %39 = arith.mulf %36, %38 : vector<8x288xf32>
    %c0_23 = arith.constant 0 : index
    %c0_24 = arith.constant 0 : index
    %40 = vector.load %arg4[%c0_23, %c0_24] : memref<8x1xf32, #tpu.memory_space<vmem>>, vector<8x1xf32>
    %41 = vector.broadcast %40 : vector<8x1xf32> to vector<8x288xf32>
    %42 = arith.addf %39, %41 : vector<8x288xf32>
    %cst_25 = arith.constant 0.000000e+00 : f32
    %43 = vector.broadcast %cst_25 : f32 to vector<8x288xf32>
    %44 = arith.maximumf %42, %43 : vector<8x288xf32>
    %c0_26 = arith.constant 0 : index
    %c0_27 = arith.constant 0 : index
    %45 = vector.load %arg8[%c0_26, %c0_27] : memref<1x288xf32, #tpu.memory_space<vmem>>, vector<1x288xf32>
    %46 = vector.broadcast %45 : vector<1x288xf32> to vector<8x288xf32>
    %47 = arith.mulf %44, %46 : vector<8x288xf32>
    %cst_28 = arith.constant 0.000000e+00 : bf16
    %48 = vector.broadcast %cst_28 : bf16 to vector<8x19xbf16>
    %c0_29 = arith.constant 0 : index
    %c0_30 = arith.constant 0 : index
    %49 = vector.load %arg13[%c0_29, %c0_30] : memref<8x342xbf16, #tpu.memory_space<vmem>>, vector<8x19xbf16>
    tpu.vector_store %arg13[%c0_29, %c0_30], %48 {strides = array<i32>} : memref<8x342xbf16, #tpu.memory_space<vmem>>, vector<8x19xbf16>,
    %cst_31 = arith.constant 0.000000e+00 : bf16
    %50 = vector.broadcast %cst_31 : bf16 to vector<8x35xbf16>
    %c0_32 = arith.constant 0 : index
    %c307 = arith.constant 307 : index
    %51 = vector.load %arg13[%c0_32, %c307] : memref<8x342xbf16, #tpu.memory_space<vmem>>, vector<8x35xbf16>
    tpu.vector_store %arg13[%c0_32, %c307], %50 {strides = array<i32>} : memref<8x342xbf16, #tpu.memory_space<vmem>>, vector<8x35xbf16>,
    %52 = arith.truncf %47 : vector<8x288xf32> to vector<8x288xbf16>
    %c0_33 = arith.constant 0 : index
    %c19 = arith.constant 19 : index
    %53 = vector.load %arg13[%c0_33, %c19] : memref<8x342xbf16, #tpu.memory_space<vmem>>, vector<8x288xbf16>
    tpu.vector_store %arg13[%c0_33, %c19], %52 {strides = array<i32>} : memref<8x342xbf16, #tpu.memory_space<vmem>>, vector<8x288xbf16>,
    %c0_34 = arith.constant 0 : index
    %c0_35 = arith.constant 0 : index
    %54 = vector.load %arg13[%c0_34, %c0_35] : memref<8x342xbf16, #tpu.memory_space<vmem>>, vector<8x342xbf16>
    %55 = vector.extract_strided_slice %54 {offsets = [0, 0], sizes = [8, 288], strides = [1, 1]} : vector<8x342xbf16> to vector<8x288xbf16>
    %56 = vector.extract_strided_slice %54 {offsets = [0, 1], sizes = [8, 288], strides = [1, 1]} : vector<8x342xbf16> to vector<8x288xbf16>
    %57 = vector.extract_strided_slice %54 {offsets = [0, 2], sizes = [8, 288], strides = [1, 1]} : vector<8x342xbf16> to vector<8x288xbf16>
    %58 = vector.extract_strided_slice %54 {offsets = [0, 18], sizes = [8, 288], strides = [1, 1]} : vector<8x342xbf16> to vector<8x288xbf16>
    %59 = vector.extract_strided_slice %54 {offsets = [0, 19], sizes = [8, 288], strides = [1, 1]} : vector<8x342xbf16> to vector<8x288xbf16>
    %60 = vector.extract_strided_slice %54 {offsets = [0, 20], sizes = [8, 288], strides = [1, 1]} : vector<8x342xbf16> to vector<8x288xbf16>
    %61 = vector.extract_strided_slice %54 {offsets = [0, 36], sizes = [8, 288], strides = [1, 1]} : vector<8x342xbf16> to vector<8x288xbf16>
    %62 = vector.extract_strided_slice %54 {offsets = [0, 37], sizes = [8, 288], strides = [1, 1]} : vector<8x342xbf16> to vector<8x288xbf16>
    %63 = vector.extract_strided_slice %54 {offsets = [0, 38], sizes = [8, 288], strides = [1, 1]} : vector<8x342xbf16> to vector<8x288xbf16>
    %c0_36 = arith.constant 0 : index
    %c0_37 = arith.constant 0 : index
    %64 = vector.load %arg5[%c0_36, %c0_37] : memref<8x72xbf16, #tpu.memory_space<vmem>>, vector<8x8xbf16>
    %cst_38 = arith.constant dense<0.000000e+00> : vector<8x288xf32>
    %65 = tpu.matmul %64, %55, %cst_38 {dimension_numbers = #tpu.dot_dimension_numbers<[1], [0], [0], [1], [0, 0, 1, 1], [], []>} : vector<8x8xbf16>, vector<8x288xbf16>, vector<8x288xf32> -> vector<8x288xf32>
    %c0_39 = arith.constant 0 : index
    %c8_40 = arith.constant 8 : index
    %66 = vector.load %arg5[%c0_39, %c8_40] : memref<8x72xbf16, #tpu.memory_space<vmem>>, vector<8x8xbf16>
    %cst_41 = arith.constant dense<0.000000e+00> : vector<8x288xf32>
    %67 = tpu.matmul %66, %56, %cst_41 {dimension_numbers = #tpu.dot_dimension_numbers<[1], [0], [0], [1], [0, 0, 1, 1], [], []>} : vector<8x8xbf16>, vector<8x288xbf16>, vector<8x288xf32> -> vector<8x288xf32>
    %68 = arith.addf %65, %67 : vector<8x288xf32>
    %c0_42 = arith.constant 0 : index
    %c16_43 = arith.constant 16 : index
    %69 = vector.load %arg5[%c0_42, %c16_43] : memref<8x72xbf16, #tpu.memory_space<vmem>>, vector<8x8xbf16>
    %cst_44 = arith.constant dense<0.000000e+00> : vector<8x288xf32>
    %70 = tpu.matmul %69, %57, %cst_44 {dimension_numbers = #tpu.dot_dimension_numbers<[1], [0], [0], [1], [0, 0, 1, 1], [], []>} : vector<8x8xbf16>, vector<8x288xbf16>, vector<8x288xf32> -> vector<8x288xf32>
    %71 = arith.addf %68, %70 : vector<8x288xf32>
    %c0_45 = arith.constant 0 : index
    %c24_46 = arith.constant 24 : index
    %72 = vector.load %arg5[%c0_45, %c24_46] : memref<8x72xbf16, #tpu.memory_space<vmem>>, vector<8x8xbf16>
    %cst_47 = arith.constant dense<0.000000e+00> : vector<8x288xf32>
    %73 = tpu.matmul %72, %58, %cst_47 {dimension_numbers = #tpu.dot_dimension_numbers<[1], [0], [0], [1], [0, 0, 1, 1], [], []>} : vector<8x8xbf16>, vector<8x288xbf16>, vector<8x288xf32> -> vector<8x288xf32>
    %74 = arith.addf %71, %73 : vector<8x288xf32>
    %c0_48 = arith.constant 0 : index
    %c32_49 = arith.constant 32 : index
    %75 = vector.load %arg5[%c0_48, %c32_49] : memref<8x72xbf16, #tpu.memory_space<vmem>>, vector<8x8xbf16>
    %cst_50 = arith.constant dense<0.000000e+00> : vector<8x288xf32>
    %76 = tpu.matmul %75, %59, %cst_50 {dimension_numbers = #tpu.dot_dimension_numbers<[1], [0], [0], [1], [0, 0, 1, 1], [], []>} : vector<8x8xbf16>, vector<8x288xbf16>, vector<8x288xf32> -> vector<8x288xf32>
    %77 = arith.addf %74, %76 : vector<8x288xf32>
    %c0_51 = arith.constant 0 : index
    %c40 = arith.constant 40 : index
    %78 = vector.load %arg5[%c0_51, %c40] : memref<8x72xbf16, #tpu.memory_space<vmem>>, vector<8x8xbf16>
    %cst_52 = arith.constant dense<0.000000e+00> : vector<8x288xf32>
    %79 = tpu.matmul %78, %60, %cst_52 {dimension_numbers = #tpu.dot_dimension_numbers<[1], [0], [0], [1], [0, 0, 1, 1], [], []>} : vector<8x8xbf16>, vector<8x288xbf16>, vector<8x288xf32> -> vector<8x288xf32>
    %80 = arith.addf %77, %79 : vector<8x288xf32>
    %c0_53 = arith.constant 0 : index
    %c48 = arith.constant 48 : index
    %81 = vector.load %arg5[%c0_53, %c48] : memref<8x72xbf16, #tpu.memory_space<vmem>>, vector<8x8xbf16>
    %cst_54 = arith.constant dense<0.000000e+00> : vector<8x288xf32>
    %82 = tpu.matmul %81, %61, %cst_54 {dimension_numbers = #tpu.dot_dimension_numbers<[1], [0], [0], [1], [0, 0, 1, 1], [], []>} : vector<8x8xbf16>, vector<8x288xbf16>, vector<8x288xf32> -> vector<8x288xf32>
    %83 = arith.addf %80, %82 : vector<8x288xf32>
    %c0_55 = arith.constant 0 : index
    %c56 = arith.constant 56 : index
    %84 = vector.load %arg5[%c0_55, %c56] : memref<8x72xbf16, #tpu.memory_space<vmem>>, vector<8x8xbf16>
    %cst_56 = arith.constant dense<0.000000e+00> : vector<8x288xf32>
    %85 = tpu.matmul %84, %62, %cst_56 {dimension_numbers = #tpu.dot_dimension_numbers<[1], [0], [0], [1], [0, 0, 1, 1], [], []>} : vector<8x8xbf16>, vector<8x288xbf16>, vector<8x288xf32> -> vector<8x288xf32>
    %86 = arith.addf %83, %85 : vector<8x288xf32>
    %c0_57 = arith.constant 0 : index
    %c64 = arith.constant 64 : index
    %87 = vector.load %arg5[%c0_57, %c64] : memref<8x72xbf16, #tpu.memory_space<vmem>>, vector<8x8xbf16>
    %cst_58 = arith.constant dense<0.000000e+00> : vector<8x288xf32>
    %88 = tpu.matmul %87, %63, %cst_58 {dimension_numbers = #tpu.dot_dimension_numbers<[1], [0], [0], [1], [0, 0, 1, 1], [], []>} : vector<8x8xbf16>, vector<8x288xbf16>, vector<8x288xf32> -> vector<8x288xf32>
    %89 = arith.addf %86, %88 : vector<8x288xf32>
    %c0_59 = arith.constant 0 : index
    %c0_60 = arith.constant 0 : index
    %90 = vector.load %arg6[%c0_59, %c0_60] : memref<8x1xf32, #tpu.memory_space<vmem>>, vector<8x1xf32>
    %91 = vector.broadcast %90 : vector<8x1xf32> to vector<8x288xf32>
    %92 = arith.mulf %89, %91 : vector<8x288xf32>
    %c0_61 = arith.constant 0 : index
    %c0_62 = arith.constant 0 : index
    %93 = vector.load %arg7[%c0_61, %c0_62] : memref<8x1xf32, #tpu.memory_space<vmem>>, vector<8x1xf32>
    %94 = vector.broadcast %93 : vector<8x1xf32> to vector<8x288xf32>
    %95 = arith.addf %92, %94 : vector<8x288xf32>
    %c0_63 = arith.constant 0 : index
    %c0_64 = arith.constant 0 : index
    %96 = vector.load %arg9[%c0_63, %c0_64] : memref<8x4xbf16, #tpu.memory_space<vmem>>, vector<8x4xbf16>
    %97 = vector.extract_strided_slice %1 {offsets = [0, 19], sizes = [4, 288], strides = [1, 1]} : vector<4x342xbf16> to vector<4x288xbf16>
    %cst_65 = arith.constant dense<0.000000e+00> : vector<8x288xf32>
    %98 = tpu.matmul %96, %97, %cst_65 {dimension_numbers = #tpu.dot_dimension_numbers<[1], [0], [0], [1], [0, 0, 1, 1], [], []>} : vector<8x4xbf16>, vector<4x288xbf16>, vector<8x288xf32> -> vector<8x288xf32>
    %c0_66 = arith.constant 0 : index
    %c0_67 = arith.constant 0 : index
    %99 = vector.load %arg10[%c0_66, %c0_67] : memref<8x1xf32, #tpu.memory_space<vmem>>, vector<8x1xf32>
    %100 = vector.broadcast %99 : vector<8x1xf32> to vector<8x288xf32>
    %101 = arith.mulf %98, %100 : vector<8x288xf32>
    %c0_68 = arith.constant 0 : index
    %c0_69 = arith.constant 0 : index
    %102 = vector.load %arg11[%c0_68, %c0_69] : memref<8x1xf32, #tpu.memory_space<vmem>>, vector<8x1xf32>
    %103 = vector.broadcast %102 : vector<8x1xf32> to vector<8x288xf32>
    %104 = arith.addf %101, %103 : vector<8x288xf32>
    %105 = arith.addf %95, %104 : vector<8x288xf32>
    %cst_70 = arith.constant 0.000000e+00 : f32
    %106 = vector.broadcast %cst_70 : f32 to vector<8x288xf32>
    %107 = arith.maximumf %105, %106 : vector<8x288xf32>
    %c0_71 = arith.constant 0 : index
    %c0_72 = arith.constant 0 : index
    %c0_73 = arith.constant 0 : index
    %108 = vector.load %arg12[%c0_71, %c0_72, %c0_73] : memref<1x8x288xf32, #tpu.memory_space<vmem>>, vector<1x8x288xf32>
    %109 = vector.shape_cast %108 : vector<1x8x288xf32> to vector<8x288xf32>
    %110 = vector.shape_cast %107 : vector<8x288xf32> to vector<1x8x288xf32>
    tpu.vector_store %arg12[%c0_71, %c0_72, %c0_73], %110 {strides = array<i32>} : memref<1x8x288xf32, #tpu.memory_space<vmem>>, vector<1x8x288xf32>,
    return
  }
  func.func @transform_0(%arg0: i32) -> (i32, i32, i32, i32) {
    %c0_i32 = arith.constant 0 : i32
    %c0_i32_0 = arith.constant 0 : i32
    %c0_i32_1 = arith.constant 0 : i32
    %c0_i32_2 = arith.constant 0 : i32
    return %arg0, %c0_i32, %c0_i32_0, %c0_i32_1 : i32, i32, i32, i32
  }
  func.func @transform_1(%arg0: i32) -> (i32, i32) {
    %c0_i32 = arith.constant 0 : i32
    %c0_i32_0 = arith.constant 0 : i32
    %c0_i32_1 = arith.constant 0 : i32
    return %c0_i32, %c0_i32_0 : i32, i32
  }
  func.func @transform_2(%arg0: i32) -> (i32, i32) {
    %c0_i32 = arith.constant 0 : i32
    %c0_i32_0 = arith.constant 0 : i32
    %c0_i32_1 = arith.constant 0 : i32
    return %c0_i32, %c0_i32_0 : i32, i32
  }
  func.func @transform_3(%arg0: i32) -> (i32, i32) {
    %c0_i32 = arith.constant 0 : i32
    %c0_i32_0 = arith.constant 0 : i32
    %c0_i32_1 = arith.constant 0 : i32
    return %c0_i32, %c0_i32_0 : i32, i32
  }
  func.func @transform_4(%arg0: i32) -> (i32, i32) {
    %c0_i32 = arith.constant 0 : i32
    %c0_i32_0 = arith.constant 0 : i32
    %c0_i32_1 = arith.constant 0 : i32
    return %c0_i32, %c0_i32_0 : i32, i32
  }
  func.func @transform_5(%arg0: i32) -> (i32, i32) {
    %c0_i32 = arith.constant 0 : i32
    %c0_i32_0 = arith.constant 0 : i32
    %c0_i32_1 = arith.constant 0 : i32
    return %c0_i32, %c0_i32_0 : i32, i32
  }
  func.func @transform_6(%arg0: i32) -> (i32, i32) {
    %c0_i32 = arith.constant 0 : i32
    %c0_i32_0 = arith.constant 0 : i32
    %c0_i32_1 = arith.constant 0 : i32
    return %c0_i32, %c0_i32_0 : i32, i32
  }
  func.func @transform_7(%arg0: i32) -> (i32, i32) {
    %c0_i32 = arith.constant 0 : i32
    %c0_i32_0 = arith.constant 0 : i32
    %c0_i32_1 = arith.constant 0 : i32
    return %c0_i32, %c0_i32_0 : i32, i32
  }
  func.func @transform_8(%arg0: i32) -> (i32, i32) {
    %c0_i32 = arith.constant 0 : i32
    %c0_i32_0 = arith.constant 0 : i32
    %c0_i32_1 = arith.constant 0 : i32
    return %c0_i32, %c0_i32_0 : i32, i32
  }
  func.func @transform_9(%arg0: i32) -> (i32, i32) {
    %c0_i32 = arith.constant 0 : i32
    %c0_i32_0 = arith.constant 0 : i32
    %c0_i32_1 = arith.constant 0 : i32
    return %c0_i32, %c0_i32_0 : i32, i32
  }
  func.func @transform_10(%arg0: i32) -> (i32, i32) {
    %c0_i32 = arith.constant 0 : i32
    %c0_i32_0 = arith.constant 0 : i32
    %c0_i32_1 = arith.constant 0 : i32
    return %c0_i32, %c0_i32_0 : i32, i32
  }
  func.func @transform_11(%arg0: i32) -> (i32, i32, i32) {
    %c0_i32 = arith.constant 0 : i32
    %c0_i32_0 = arith.constant 0 : i32
    %c0_i32_1 = arith.constant 0 : i32
    return %arg0, %c0_i32, %c0_i32_0 : i32, i32, i32
  }
}

</mosaic_0001>

<llo_original>
// kernel: residual_block.1
$region0: #{residual_block.1}
  #allocation0 [shape = 'u32[]', space=smem, size = 0x4, offset = 0x4, fixed_abs, tag = 'smem constant byte address 0x4 - core index']
  #allocation1 [shape = 'u32[144,128]{1,0:T(1,128)}', space=vmem, size = 0x12000, scoped, tag = 'internal scratch']
  #allocation2 [shape = 'bf16[8,342]{1,0:T(8,128)(2,1)}', space=vmem, size = 0x1800, scoped, tag = 'scratch operand']
  %s0 = inlined_call_operand.vmem [shape: bf16[2,1,4,342], index: 0, kind: input, shape index: {}]
  %s1 = inlined_call_operand.vmem [shape: bf16[8,36], index: 1, kind: input, shape index: {}]
  %s2 = inlined_call_operand.vmem [shape: f32[8,1], index: 2, kind: input, shape index: {}]
  %s3 = inlined_call_operand.vmem [shape: f32[8,1], index: 3, kind: input, shape index: {}]
  %s4 = inlined_call_operand.vmem [shape: bf16[8,72], index: 4, kind: input, shape index: {}]
  %s5 = inlined_call_operand.vmem [shape: f32[8,1], index: 5, kind: input, shape index: {}]
  %s6 = inlined_call_operand.vmem [shape: f32[8,1], index: 6, kind: input, shape index: {}]
  %s7 = inlined_call_operand.vmem [shape: f32[1,288], index: 7, kind: input, shape index: {}]
  %s8 = inlined_call_operand.vmem [shape: bf16[8,4], index: 8, kind: input, shape index: {}]
  %s9 = inlined_call_operand.vmem [shape: f32[8,1], index: 9, kind: input, shape index: {}]
  %s10 = inlined_call_operand.vmem [shape: f32[8,1], index: 10, kind: input, shape index: {}]
  %s11 = inlined_call_operand.vmem [shape: f32[2,8,288], index: 11, kind: output, shape index: {}]
  %s12 = sld [smem:[#allocation0]]
  $region77: #{residual_block.1} parent=0
    _
  %s14 = ssub.s32 1, %s12
  %s15 = scalar_select 0, %s14, %s12
  loop: start=0, step=1, limit=4
  $region2: #{residual_block.1} parent=0 // loop_pre_header
    _
  $region3: #{residual_block.1} parent=0 // loop_header
    %s17 = sphi 0, %s21
    %p18 = scmp.ge.s32.totalorder %s17, 4
    %s27 = sphi 0, %s29
    %s30 = sphi 0, %s27
    %s31 = sphi 0, %s30
    %s47 = sphi 0, %s31
    %s51 = sphi 0, %s51
    %s53 = sphi 0, %s51
    %s54 = sphi 0, %s53
    %s68 = sphi 0, %s54
    %s72 = sphi 0, %s72
    %s74 = sphi 0, %s72
    %s75 = sphi 0, %s74
    %s89 = sphi 0, %s75
    %s93 = sphi 0, %s93
    %s95 = sphi 0, %s93
    %s96 = sphi 0, %s95
    %s110 = sphi 0, %s96
    %s114 = sphi 0, %s114
    %s116 = sphi 0, %s114
    %s117 = sphi 0, %s116
    %s131 = sphi 0, %s117
    %s135 = sphi 0, %s135
    %s137 = sphi 0, %s135
    %s138 = sphi 0, %s137
    %s152 = sphi 0, %s138
    %s156 = sphi 0, %s156
    %s158 = sphi 0, %s156
    %s159 = sphi 0, %s158
    %s173 = sphi 0, %s159
    %s177 = sphi 0, %s177
    %s179 = sphi 0, %s177
    %s180 = sphi 0, %s179
    %s194 = sphi 0, %s180
    %s198 = sphi 0, %s198
    %s200 = sphi 0, %s198
    %s201 = sphi 0, %s200
    %s215 = sphi 0, %s201
    %s219 = sphi 0, %s219
    %s221 = sphi 0, %s219
    %s222 = sphi 0, %s221
    %s236 = sphi 0, %s222
    %s240 = sphi 0, %s240
    %s242 = sphi 0, %s240
    %s243 = sphi 0, %s242
    %s257 = sphi 0, %s243
    %s263 = sphi 0, %s265
    %s266 = sphi 0, %s263
    %s267 = sphi 0, %s266
    %s283 = sphi 0, %s267
  $region4: #{residual_block.1} parent=0 // loop_header_branch
    %20 = sbr.rel (%p18) target = $region8
  $region5: #{residual_block.1} parent=0 // loop_body
    %s22 = ssub.s32 %s17, 1
    %s23 = ssub.s32 %s17, 2
    %s24 = sadd.s32 %s17, 1
    %s25 = ssub.s32 %s17, %s24
    %p26 = scmp.eq.s32.totalorder %s25, 0
    %s28 = sadd.s32 %s27, 1
    %s29 = scalar_select %p26, %s27, %s28
    %p32 = pneg %p26
    %p33 = scmp.eq.s32.totalorder %s17, 1
    %p34 = por %p32, %p33
    %p35 = scmp.ne.s32.totalorder %s27, %s30
    %p36 = scmp.eq.s32.totalorder %s17, 0
    %p37 = por %p35, %p36
    %p38 = scmp.ne.s32.totalorder %s27, %s30
    %p39 = scmp.eq.s32.totalorder %s22, 1
    %p40 = por %p38, %p39
    %p41 = scmp.ne.s32.totalorder %s30, %s31
    %p42 = scmp.eq.s32.totalorder %s22, 0
    %p43 = por %p41, %p42
    %p44 = scmp.ne.s32.totalorder %s30, %s31
    %p45 = scmp.eq.s32.totalorder %s23, 1
    %p46 = por %p44, %p45
    %p48 = scmp.ne.s32.totalorder %s31, %s47
    %p49 = scmp.eq.s32.totalorder %s23, 0
    %p50 = por %p48, %p49
    %s52 = sadd.s32 %s51, 1
    %p55 = scmp.eq.s32.totalorder %s17, 1
    %p56 = scmp.ne.s32.totalorder %s51, %s53
    %p57 = scmp.eq.s32.totalorder %s17, 0
    %p58 = por %p56, %p57
    %p59 = scmp.ne.s32.totalorder %s51, %s53
    %p60 = scmp.eq.s32.totalorder %s22, 1
    %p61 = por %p59, %p60
    %p62 = scmp.ne.s32.totalorder %s53, %s54
    %p63 = scmp.eq.s32.totalorder %s22, 0
    %p64 = por %p62, %p63
    %p65 = scmp.ne.s32.totalorder %s53, %s54
    %p66 = scmp.eq.s32.totalorder %s23, 1
    %p67 = por %p65, %p66
    %p69 = scmp.ne.s32.totalorder %s54, %s68
    %p70 = scmp.eq.s32.totalorder %s23, 0
    %p71 = por %p69, %p70
    %s73 = sadd.s32 %s72, 1
    %p76 = scmp.eq.s32.totalorder %s17, 1
    %p77 = scmp.ne.s32.totalorder %s72, %s74
    %p78 = scmp.eq.s32.totalorder %s17, 0
    %p79 = por %p77, %p78
    %p80 = scmp.ne.s32.totalorder %s72, %s74
    %p81 = scmp.eq.s32.totalorder %s22, 1
    %p82 = por %p80, %p81
    %p83 = scmp.ne.s32.totalorder %s74, %s75
    %p84 = scmp.eq.s32.totalorder %s22, 0
    %p85 = por %p83, %p84
    %p86 = scmp.ne.s32.totalorder %s74, %s75
    %p87 = scmp.eq.s32.totalorder %s23, 1
    %p88 = por %p86, %p87
    %p90 = scmp.ne.s32.totalorder %s75, %s89
    %p91 = scmp.eq.s32.totalorder %s23, 0
    %p92 = por %p90, %p91
    %s94 = sadd.s32 %s93, 1
    %p97 = scmp.eq.s32.totalorder %s17, 1
    %p98 = scmp.ne.s32.totalorder %s93, %s95
    %p99 = scmp.eq.s32.totalorder %s17, 0
    %p100 = por %p98, %p99
    %p101 = scmp.ne.s32.totalorder %s93, %s95
    %p102 = scmp.eq.s32.totalorder %s22, 1
    %p103 = por %p101, %p102
    %p104 = scmp.ne.s32.totalorder %s95, %s96
    %p105 = scmp.eq.s32.totalorder %s22, 0
    %p106 = por %p104, %p105
    %p107 = scmp.ne.s32.totalorder %s95, %s96
    %p108 = scmp.eq.s32.totalorder %s23, 1
    %p109 = por %p107, %p108
    %p111 = scmp.ne.s32.totalorder %s96, %s110
    %p112 = scmp.eq.s32.totalorder %s23, 0
    %p113 = por %p111, %p112
    %s115 = sadd.s32 %s114, 1
    %p118 = scmp.eq.s32.totalorder %s17, 1
    %p119 = scmp.ne.s32.totalorder %s114, %s116
    %p120 = scmp.eq.s32.totalorder %s17, 0
    %p121 = por %p119, %p120
    %p122 = scmp.ne.s32.totalorder %s114, %s116
    %p123 = scmp.eq.s32.totalorder %s22, 1
    %p124 = por %p122, %p123
    %p125 = scmp.ne.s32.totalorder %s116, %s117
    %p126 = scmp.eq.s32.totalorder %s22, 0
    %p127 = por %p125, %p126
    %p128 = scmp.ne.s32.totalorder %s116, %s117
    %p129 = scmp.eq.s32.totalorder %s23, 1
    %p130 = por %p128, %p129
    %p132 = scmp.ne.s32.totalorder %s117, %s131
    %p133 = scmp.eq.s32.totalorder %s23, 0
    %p134 = por %p132, %p133
    %s136 = sadd.s32 %s135, 1
    %p139 = scmp.eq.s32.totalorder %s17, 1
    %p140 = scmp.ne.s32.totalorder %s135, %s137
    %p141 = scmp.eq.s32.totalorder %s17, 0
    %p142 = por %p140, %p141
    %p143 = scmp.ne.s32.totalorder %s135, %s137
    %p144 = scmp.eq.s32.totalorder %s22, 1
    %p145 = por %p143, %p144
    %p146 = scmp.ne.s32.totalorder %s137, %s138
    %p147 = scmp.eq.s32.totalorder %s22, 0
    %p148 = por %p146, %p147
    %p149 = scmp.ne.s32.totalorder %s137, %s138
    %p150 = scmp.eq.s32.totalorder %s23, 1
    %p151 = por %p149, %p150
    %p153 = scmp.ne.s32.totalorder %s138, %s152
    %p154 = scmp.eq.s32.totalorder %s23, 0
    %p155 = por %p153, %p154
    %s157 = sadd.s32 %s156, 1
    %p160 = scmp.eq.s32.totalorder %s17, 1
    %p161 = scmp.ne.s32.totalorder %s156, %s158
    %p162 = scmp.eq.s32.totalorder %s17, 0
    %p163 = por %p161, %p162
    %p164 = scmp.ne.s32.totalorder %s156, %s158
    %p165 = scmp.eq.s32.totalorder %s22, 1
    %p166 = por %p164, %p165
    %p167 = scmp.ne.s32.totalorder %s158, %s159
    %p168 = scmp.eq.s32.totalorder %s22, 0
    %p169 = por %p167, %p168
    %p170 = scmp.ne.s32.totalorder %s158, %s159
    %p171 = scmp.eq.s32.totalorder %s23, 1
    %p172 = por %p170, %p171
    %p174 = scmp.ne.s32.totalorder %s159, %s173
    %p175 = scmp.eq.s32.totalorder %s23, 0
    %p176 = por %p174, %p175
    %s178 = sadd.s32 %s177, 1
    %p181 = scmp.eq.s32.totalorder %s17, 1
    %p182 = scmp.ne.s32.totalorder %s177, %s179
    %p183 = scmp.eq.s32.totalorder %s17, 0
    %p184 = por %p182, %p183
    %p185 = scmp.ne.s32.totalorder %s177, %s179
    %p186 = scmp.eq.s32.totalorder %s22, 1
    %p187 = por %p185, %p186
    %p188 = scmp.ne.s32.totalorder %s179, %s180
    %p189 = scmp.eq.s32.totalorder %s22, 0
    %p190 = por %p188, %p189
    %p191 = scmp.ne.s32.totalorder %s179, %s180
    %p192 = scmp.eq.s32.totalorder %s23, 1
    %p193 = por %p191, %p192
    %p195 = scmp.ne.s32.totalorder %s180, %s194
    %p196 = scmp.eq.s32.totalorder %s23, 0
    %p197 = por %p195, %p196
    %s199 = sadd.s32 %s198, 1
    %p202 = scmp.eq.s32.totalorder %s17, 1
    %p203 = scmp.ne.s32.totalorder %s198, %s200
    %p204 = scmp.eq.s32.totalorder %s17, 0
    %p205 = por %p203, %p204
    %p206 = scmp.ne.s32.totalorder %s198, %s200
    %p207 = scmp.eq.s32.totalorder %s22, 1
    %p208 = por %p206, %p207
    %p209 = scmp.ne.s32.totalorder %s200, %s201
    %p210 = scmp.eq.s32.totalorder %s22, 0
    %p211 = por %p209, %p210
    %p212 = scmp.ne.s32.totalorder %s200, %s201
    %p213 = scmp.eq.s32.totalorder %s23, 1
    %p214 = por %p212, %p213
    %p216 = scmp.ne.s32.totalorder %s201, %s215
    %p217 = scmp.eq.s32.totalorder %s23, 0
    %p218 = por %p216, %p217
    %s220 = sadd.s32 %s219, 1
    %p223 = scmp.eq.s32.totalorder %s17, 1
    %p224 = scmp.ne.s32.totalorder %s219, %s221
    %p225 = scmp.eq.s32.totalorder %s17, 0
    %p226 = por %p224, %p225
    %p227 = scmp.ne.s32.totalorder %s219, %s221
    %p228 = scmp.eq.s32.totalorder %s22, 1
    %p229 = por %p227, %p228
    %p230 = scmp.ne.s32.totalorder %s221, %s222
    %p231 = scmp.eq.s32.totalorder %s22, 0
    %p232 = por %p230, %p231
    %p233 = scmp.ne.s32.totalorder %s221, %s222
    %p234 = scmp.eq.s32.totalorder %s23, 1
    %p235 = por %p233, %p234
    %p237 = scmp.ne.s32.totalorder %s222, %s236
    %p238 = scmp.eq.s32.totalorder %s23, 0
    %p239 = por %p237, %p238
    %s241 = sadd.s32 %s240, 1
    %p244 = scmp.eq.s32.totalorder %s17, 1
    %p245 = scmp.ne.s32.totalorder %s240, %s242
    %p246 = scmp.eq.s32.totalorder %s17, 0
    %p247 = por %p245, %p246
    %p248 = scmp.ne.s32.totalorder %s240, %s242
    %p249 = scmp.eq.s32.totalorder %s22, 1
    %p250 = por %p248, %p249
    %p251 = scmp.ne.s32.totalorder %s242, %s243
    %p252 = scmp.eq.s32.totalorder %s22, 0
    %p253 = por %p251, %p252
    %p254 = scmp.ne.s32.totalorder %s242, %s243
    %p255 = scmp.eq.s32.totalorder %s23, 1
    %p256 = por %p254, %p255
    %p258 = scmp.ne.s32.totalorder %s243, %s257
    %p259 = scmp.eq.s32.totalorder %s23, 0
    %p260 = por %p258, %p259
    %s261 = ssub.s32 %s17, %s24
    %p262 = scmp.eq.s32.totalorder %s261, 0
    %s264 = sadd.s32 %s263, 1
    %s265 = scalar_select %p262, %s263, %s264
    %p268 = pneg %p262
    %p269 = scmp.eq.s32.totalorder %s17, 1
    %p270 = por %p268, %p269
    %p271 = scmp.ne.s32.totalorder %s263, %s266
    %p272 = scmp.eq.s32.totalorder %s17, 0
    %p273 = por %p271, %p272
    %p274 = scmp.ne.s32.totalorder %s263, %s266
    %p275 = scmp.eq.s32.totalorder %s22, 1
    %p276 = por %p274, %p275
    %p277 = scmp.ne.s32.totalorder %s266, %s267
    %p278 = scmp.eq.s32.totalorder %s22, 0
    %p279 = por %p277, %p278
    %p280 = scmp.ne.s32.totalorder %s266, %s267
    %p281 = scmp.eq.s32.totalorder %s23, 1
    %p282 = por %p280, %p281
    %p284 = scmp.ne.s32.totalorder %s267, %s283
    %p285 = scmp.eq.s32.totalorder %s23, 0
    %p286 = por %p284, %p285
    %p287 = scmp.le.s32.totalorder 1, %s17
    %p288 = scmp.lt.s32.totalorder %s17, 3
    %p289 = pnand %p287, %p288
    %p290 = pneg %p289
    // Predicated region
    $region9: #{residual_block.1} parent=5 // pred_check
      _
    $region10: #{residual_block.1} parent=5 // pred_check_branch
      %292 = sbr.rel (%p289) target = $region12
    $region11: #{residual_block.1} parent=5 // pred_region
      %s293 = ssub.s32 %s17, 1
      // Predicated region
      $region13: #{residual_block.1} parent=11 // pred_check
        %p294 = pneg %p64
      $region14: #{residual_block.1} parent=11 // pred_check_branch
        %296 = sbr.rel (%p294) target = $region16
      $region15: #{residual_block.1} parent=11 // pred_region
        _
      $region16: #{residual_block.1} parent=11 // pred_fallthru
        _
      // Predicated region
      $region17: #{residual_block.1} parent=11 // pred_check
        %p297 = pneg %p85
      $region18: #{residual_block.1} parent=11 // pred_check_branch
        %299 = sbr.rel (%p297) target = $region20
      $region19: #{residual_block.1} parent=11 // pred_region
        _
      $region20: #{residual_block.1} parent=11 // pred_fallthru
        _
      // Predicated region
      $region21: #{residual_block.1} parent=11 // pred_check
        %p300 = pneg %p106
      $region22: #{residual_block.1} parent=11 // pred_check_branch
        %302 = sbr.rel (%p300) target = $region24
      $region23: #{residual_block.1} parent=11 // pred_region
        _
      $region24: #{residual_block.1} parent=11 // pred_fallthru
        _
      // Predicated region
      $region25: #{residual_block.1} parent=11 // pred_check
        %p303 = pneg %p127
      $region26: #{residual_block.1} parent=11 // pred_check_branch
        %305 = sbr.rel (%p303) target = $region28
      $region27: #{residual_block.1} parent=11 // pred_region
        _
      $region28: #{residual_block.1} parent=11 // pred_fallthru
        _
      // Predicated region
      $region29: #{residual_block.1} parent=11 // pred_check
        %p306 = pneg %p148
      $region30: #{residual_block.1} parent=11 // pred_check_branch
        %308 = sbr.rel (%p306) target = $region32
      $region31: #{residual_block.1} parent=11 // pred_region
        _
      $region32: #{residual_block.1} parent=11 // pred_fallthru
        _
      // Predicated region
      $region33: #{residual_block.1} parent=11 // pred_check
        %p309 = pneg %p169
      $region34: #{residual_block.1} parent=11 // pred_check_branch
        %311 = sbr.rel (%p309) target = $region36
      $region35: #{residual_block.1} parent=11 // pred_region
        _
      $region36: #{residual_block.1} parent=11 // pred_fallthru
        _
      // Predicated region
      $region37: #{residual_block.1} parent=11 // pred_check
        %p312 = pneg %p190
      $region38: #{residual_block.1} parent=11 // pred_check_branch
        %314 = sbr.rel (%p312) target = $region40
      $region39: #{residual_block.1} parent=11 // pred_region
        _
      $region40: #{residual_block.1} parent=11 // pred_fallthru
        _
      // Predicated region
      $region41: #{residual_block.1} parent=11 // pred_check
        %p315 = pneg %p211
      $region42: #{residual_block.1} parent=11 // pred_check_branch
        %317 = sbr.rel (%p315) target = $region44
      $region43: #{residual_block.1} parent=11 // pred_region
        _
      $region44: #{residual_block.1} parent=11 // pred_fallthru
        _
      // Predicated region
      $region45: #{residual_block.1} parent=11 // pred_check
        %p318 = pneg %p232
      $region46: #{residual_block.1} parent=11 // pred_check_branch
        %320 = sbr.rel (%p318) target = $region48
      $region47: #{residual_block.1} parent=11 // pred_region
        _
      $region48: #{residual_block.1} parent=11 // pred_fallthru
        _
      // Predicated region
      $region49: #{residual_block.1} parent=11 // pred_check
        %p321 = pneg %p253
      $region50: #{residual_block.1} parent=11 // pred_check_branch
        %323 = sbr.rel (%p321) target = $region52
      $region51: #{residual_block.1} parent=11 // pred_region
        _
      $region52: #{residual_block.1} parent=11 // pred_fallthru
        _
    $region12: #{residual_block.1} parent=5 // pred_fallthru
      _
    %p324 = scmp.lt.s32.totalorder %s17, 2
    // Predicated region
    $region53: #{residual_block.1} parent=5 // pred_check
      %p325 = pneg %p324
    $region54: #{residual_block.1} parent=5 // pred_check_branch
      %327 = sbr.rel (%p325) target = $region56
    $region55: #{residual_block.1} parent=5 // pred_region
      // Predicated region
      $region57: #{residual_block.1} parent=55 // pred_check
        %p328 = pneg %p37
      $region58: #{residual_block.1} parent=55 // pred_check_branch
        %330 = sbr.rel (%p328) target = $region60
      $region59: #{residual_block.1} parent=55 // pred_region
        %p331 = scmp.lt.s32.totalorder %s17, 1
        %s332 = scalar_select %p331, %s17, 1
        %s333 = smul.addr %s332, 3
        %s334 = smul.addr %s333, 2
        %s335 = scalar_lea.vmem %s0, %s334
      $region60: #{residual_block.1} parent=55 // pred_fallthru
        _
    $region56: #{residual_block.1} parent=5 // pred_fallthru
      _
    %p336 = scmp.le.s32.totalorder 1, %s17
    %p337 = scmp.lt.s32.totalorder %s17, 3
    %p338 = pnand %p336, %p337
    %p339 = pneg %p338
    // Predicated region
    $region61: #{residual_block.1} parent=5 // pred_check
      _
    $region62: #{residual_block.1} parent=5 // pred_check_branch
      %341 = sbr.rel (%p338) target = $region64
    $region63: #{residual_block.1} parent=5 // pred_region
      %s342 = ssub.s32 %s17, 1
      %p343 = scmp.lt.s32.totalorder %s22, 1
      %s344 = scalar_select %p343, %s22, 1
      %s345 = smul.addr %s344, 3
      %s346 = smul.addr %s345, 2
      %s347 = scalar_lea.vmem %s0, %s346
      %p348 = pneg %p43
      %p349 = pneg %p40
      %p350 = pneg %p64
      %p351 = pneg %p61
      %p352 = pneg %p85
      %p353 = pneg %p82
      %p354 = pneg %p106
      %p355 = pneg %p103
      %p356 = pneg %p127
      %p357 = pneg %p124
      %p358 = pneg %p148
      %p359 = pneg %p145
      %p360 = pneg %p169
      %p361 = pneg %p166
      %p362 = pneg %p190
      %p363 = pneg %p187
      %p364 = pneg %p211
      %p365 = pneg %p208
      %p366 = pneg %p232
      %p367 = pneg %p229
      %p368 = pneg %p253
      %p369 = pneg %p250
      %p370 = pneg %p279
      %p371 = pneg %p276
      %p372 = scmp.lt.s32.totalorder %s22, 1
      %s373 = scalar_select %p372, %s22, 1
      %s374 = smul.addr %s373, 3
      %s375 = smul.addr %s374, 8
      %s376 = scalar_lea.vmem %s11, %s375
      %p377 = scmp.lt.s32.totalorder %s22, 1
      %s378 = scalar_select %p377, %s22, 1
      %s379 = smul.addr %s378, 3
      %s380 = smul.addr %s379, 2
      %s381 = scalar_lea.vmem %s0, %s380
      %p382 = scmp.lt.s32.totalorder %s22, 1
      %s383 = scalar_select %p382, %s22, 1
      %s384 = smul.addr %s383, 3
      %s385 = smul.addr %s384, 8
      %s386 = scalar_lea.vmem %s11, %s385
      %v388 = vld [vmem:[%s381] sm:$0x3f]
      %v389 = vld [vmem:[%s1] sm:$0xf]
      %v391 = vunpack.c.l.b16 %v389
      %v392 = vpack.c.b16 %v391, %v391
      %393 = vrot.lane.b32.xlu0 %v392, 124
      %v394 = vpop.permute.xlu0 %393
      %v396 = vcombine.high %v388, %v388
      %v398 = vunpack.c.l.s4 1983009808
      %v399 = vunpack.c.0.s8 %v398
      %v400 = vlaneseq
      %v401 = vshrl.u32 %v400, 7
      %v402 = vsub.s32 %v399, %v401
      %v403 = vrot.slane %v388, %v402
      %v405 = vunpack.c.l.s4 1983009808
      %v406 = vunpack.c.0.s8 %v405
      %v407 = vlaneseq
      %v408 = vshrl.u32 %v407, 7
      %v409 = vsub.s32 %v406, %v408
      %v410 = vrot.slane %v396, %v409
      %v411 = vcombine.high %v403, %v403
      %412 = vrot.lane.b32.xlu0 %v403, 127
      %v413 = vpop.permute.xlu0 %412
      %414 = vrot.lane.b32.xlu0 %v411, 127
      %v415 = vpop.permute.xlu0 %414
      %416 = vrot.lane.b32.xlu0 %v410, 127
      %v417 = vpop.permute.xlu0 %416
      %vm418 = vcmask 1039360
      %v419 = vsel %vm418, %v413, %v415
      %v420 = vsel %vm418, %v415, %v417
      %vm421 = vcmask 31744
      %v423 = vsel %vm421, %v394, 0
      %vm425 = vcmask 1041408
      %v427 = vsel %vm425, %v419, 0
      %v430 = vsel %vm425, %v420, 0
      %v433 = vsel %vm425, %v417, 0
      %435 = vmatprep.subr.bf16.mxu0 0
      %436 = vmatpush1.bf16.msra.mxu0 0
      %437 = vmatprep.subr.bf16.mxu0 0
      %438 = vmatpush1.bf16.msra.mxu0 0
      %439 = vmatprep.subr.bf16.mxu0 0
      %440 = vmatpush1.bf16.msra.mxu0 0
      %441 = vmatprep.subr.bf16.mxu0 0
      %442 = vmatpush1.bf16.msra.mxu0 0
      %443 = vmatprep.subr.bf16.mxu0 0
      %444 = vmatpush1.bf16.msra.mxu0 0
      %445 = vmatprep.subr.bf16.mxu0 0
      %446 = vmatpush1.bf16.msra.mxu0 0
      %447 = vmatprep.subr.bf16.mxu0 0
      %448 = vmatpush1.bf16.msra.mxu0 0
      %449 = vmatprep.subr.bf16.mxu0 %v430
      %450 = vmatpush1.bf16.msra.mxu0 %v427
      %451 = vmatprep.subr.bf16.mxu0 0
      %452 = vmatpush2.bf16.msra.mxu0 0
      %453 = vmatprep.subr.bf16.mxu0 0
      %454 = vmatpush2.bf16.msra.mxu0 0
      %455 = vmatprep.subr.bf16.mxu0 0
      %456 = vmatpush2.bf16.msra.mxu0 0
      %457 = vmatprep.subr.bf16.mxu0 0
      %458 = vmatpush2.bf16.msra.mxu0 0
      %459 = vmatprep.subr.bf16.mxu0 0
      %460 = vmatpush2.bf16.msra.mxu0 0
      %461 = vmatprep.subr.bf16.mxu0 0
      %462 = vmatpush2.bf16.msra.mxu0 0
      %463 = vmatprep.subr.bf16.mxu0 0
      %464 = vmatpush2.bf16.msra.mxu0 0
      %465 = vmatprep.subr.bf16.mxu0 0
      %466 = vmatpush2.bf16.msra.mxu0 0
      %467 = vmatprep.mubr.bf16.mxu0 0
      %468 = vmatmul.mubr.bf16.gmra.mxu0 %v423
      %v469 = vpop.f32.mrf.mxu0
      %v470 = vadd.f32 0.0, %v469
      %v471 = vpop.f32.mrf.mxu0
      %v472 = vadd.f32 0.0, %v471
      %v473 = vpop.f32.mrf.mxu0
      %v474 = vpop.f32.mrf.mxu0
      %475 = vdwg.mxu0
      %476 = vmatprep.subr.bf16.mxu0 0
      %477 = vmatpush1.bf16.msra.mxu0 0
      %478 = vmatprep.subr.bf16.mxu0 0
      %479 = vmatpush1.bf16.msra.mxu0 0
      %480 = vmatprep.subr.bf16.mxu0 0
      %481 = vmatpush1.bf16.msra.mxu0 0
      %482 = vmatprep.subr.bf16.mxu0 0
      %483 = vmatpush1.bf16.msra.mxu0 0
      %484 = vmatprep.subr.bf16.mxu0 0
      %485 = vmatpush1.bf16.msra.mxu0 0
      %486 = vmatprep.subr.bf16.mxu0 0
      %487 = vmatpush1.bf16.msra.mxu0 0
      %488 = vmatprep.subr.bf16.mxu0 0
      %489 = vmatpush1.bf16.msra.mxu0 0
      %490 = vmatprep.subr.bf16.mxu0 0
      %491 = vmatpush1.bf16.msra.mxu0 %v433
      %492 = vmatprep.subr.bf16.mxu0 0
      %493 = vmatpush2.bf16.msra.mxu0 0
      %494 = vmatprep.subr.bf16.mxu0 0
      %495 = vmatpush2.bf16.msra.mxu0 0
      %496 = vmatprep.subr.bf16.mxu0 0
      %497 = vmatpush2.bf16.msra.mxu0 0
      %498 = vmatprep.subr.bf16.mxu0 0
      %499 = vmatpush2.bf16.msra.mxu0 0
      %500 = vmatprep.subr.bf16.mxu0 0
      %501 = vmatpush2.bf16.msra.mxu0 0
      %502 = vmatprep.subr.bf16.mxu0 0
      %503 = vmatpush2.bf16.msra.mxu0 0
      %504 = vmatprep.subr.bf16.mxu0 0
      %505 = vmatpush2.bf16.msra.mxu0 0
      %506 = vmatprep.subr.bf16.mxu0 0
      %507 = vmatpush2.bf16.msra.mxu0 0
      %508 = vmatprep.mubr.bf16.mxu0 0
      %509 = vmatmul.mubr.bf16.gmra.mxu0 %v423
      %v510 = vpop.f32.mrf.mxu0
      %v511 = vadd.f32 0.0, %v510
      %v512 = vpop.f32.mrf.mxu0
      %v513 = vpop.f32.mrf.mxu0
      %v514 = vpop.f32.mrf.mxu0
      %515 = vdwg.mxu0
      %v517 = vsel %vm421, %v389, 0
      %v520 = vsel %vm425, %v403, 0
      %v523 = vsel %vm425, %v411, 0
      %v526 = vsel %vm425, %v410, 0
      %528 = vmatprep.subr.bf16.mxu0 0
      %529 = vmatpush1.bf16.msra.mxu0 0
      %530 = vmatprep.subr.bf16.mxu0 0
      %531 = vmatpush1.bf16.msra.mxu0 0
      %532 = vmatprep.subr.bf16.mxu0 0
      %533 = vmatpush1.bf16.msra.mxu0 0
      %534 = vmatprep.subr.bf16.mxu0 0
      %535 = vmatpush1.bf16.msra.mxu0 0
      %536 = vmatprep.subr.bf16.mxu0 0
      %537 = vmatpush1.bf16.msra.mxu0 0
      %538 = vmatprep.subr.bf16.mxu0 0
      %539 = vmatpush1.bf16.msra.mxu0 0
      %540 = vmatprep.subr.bf16.mxu0 0
      %541 = vmatpush1.bf16.msra.mxu0 0
      %542 = vmatprep.subr.bf16.mxu0 %v523
      %543 = vmatpush1.bf16.msra.mxu0 %v520
      %544 = vmatprep.subr.bf16.mxu0 0
      %545 = vmatpush2.bf16.msra.mxu0 0
      %546 = vmatprep.subr.bf16.mxu0 0
      %547 = vmatpush2.bf16.msra.mxu0 0
      %548 = vmatprep.subr.bf16.mxu0 0
      %549 = vmatpush2.bf16.msra.mxu0 0
      %550 = vmatprep.subr.bf16.mxu0 0
      %551 = vmatpush2.bf16.msra.mxu0 0
      %552 = vmatprep.subr.bf16.mxu0 0
      %553 = vmatpush2.bf16.msra.mxu0 0
      %554 = vmatprep.subr.bf16.mxu0 0
      %555 = vmatpush2.bf16.msra.mxu0 0
      %556 = vmatprep.subr.bf16.mxu0 0
      %557 = vmatpush2.bf16.msra.mxu0 0
      %558 = vmatprep.subr.bf16.mxu0 0
      %559 = vmatpush2.bf16.msra.mxu0 0
      %560 = vmatprep.mubr.bf16.mxu0 0
      %561 = vmatmul.mubr.bf16.gmra.mxu0 %v517
      %v562 = vpop.f32.mrf.mxu0
      %v563 = vadd.f32 %v470, %v562
      %v564 = vpop.f32.mrf.mxu0
      %v565 = vadd.f32 %v472, %v564
      %v566 = vpop.f32.mrf.mxu0
      %v567 = vpop.f32.mrf.mxu0
      %568 = vdwg.mxu0
      %569 = vmatprep.subr.bf16.mxu0 0
      %570 = vmatpush1.bf16.msra.mxu0 0
      %571 = vmatprep.subr.bf16.mxu0 0
      %572 = vmatpush1.bf16.msra.mxu0 0
      %573 = vmatprep.subr.bf16.mxu0 0
      %574 = vmatpush1.bf16.msra.mxu0 0
      %575 = vmatprep.subr.bf16.mxu0 0
      %576 = vmatpush1.bf16.msra.mxu0 0
      %577 = vmatprep.subr.bf16.mxu0 0
      %578 = vmatpush1.bf16.msra.mxu0 0
      %579 = vmatprep.subr.bf16.mxu0 0
      %580 = vmatpush1.bf16.msra.mxu0 0
      %581 = vmatprep.subr.bf16.mxu0 0
      %582 = vmatpush1.bf16.msra.mxu0 0
      %583 = vmatprep.subr.bf16.mxu0 0
      %584 = vmatpush1.bf16.msra.mxu0 %v526
      %585 = vmatprep.subr.bf16.mxu0 0
      %586 = vmatpush2.bf16.msra.mxu0 0
      %587 = vmatprep.subr.bf16.mxu0 0
      %588 = vmatpush2.bf16.msra.mxu0 0
      %589 = vmatprep.subr.bf16.mxu0 0
      %590 = vmatpush2.bf16.msra.mxu0 0
      %591 = vmatprep.subr.bf16.mxu0 0
      %592 = vmatpush2.bf16.msra.mxu0 0
      %593 = vmatprep.subr.bf16.mxu0 0
      %594 = vmatpush2.bf16.msra.mxu0 0
      %595 = vmatprep.subr.bf16.mxu0 0
      %596 = vmatpush2.bf16.msra.mxu0 0
      %597 = vmatprep.subr.bf16.mxu0 0
      %598 = vmatpush2.bf16.msra.mxu0 0
      %599 = vmatprep.subr.bf16.mxu0 0
      %600 = vmatpush2.bf16.msra.mxu0 0
      %601 = vmatprep.mubr.bf16.mxu0 0
      %602 = vmatmul.mubr.bf16.gmra.mxu0 %v517
      %v603 = vpop.f32.mrf.mxu0
      %v604 = vadd.f32 %v511, %v603
      %v605 = vpop.f32.mrf.mxu0
      %v606 = vpop.f32.mrf.mxu0
      %v607 = vpop.f32.mrf.mxu0
      %608 = vdwg.mxu0
      %v609 = vld [vmem:[%s1] sm:$0xf]
      %v611 = vunpack.c.l.b16 %v609
      %v612 = vpack.c.b16 %v611, %v611
      %613 = vrot.lane.b32.xlu0 %v612, 120
      %v614 = vpop.permute.xlu0 %613
      %615 = vrot.lane.b32.xlu0 %v403, 126
      %v616 = vpop.permute.xlu0 %615
      %617 = vrot.lane.b32.xlu0 %v411, 126
      %v618 = vpop.permute.xlu0 %617
      %619 = vrot.lane.b32.xlu0 %v410, 126
      %v620 = vpop.permute.xlu0 %619
      %vm621 = vcmask 1031168
      %v622 = vsel %vm621, %v616, %v618
      %v623 = vsel %vm621, %v618, %v620
      %v625 = vsel %vm421, %v614, 0
      %v628 = vsel %vm425, %v622, 0
      %v631 = vsel %vm425, %v623, 0
      %v634 = vsel %vm425, %v620, 0
      %636 = vmatprep.subr.bf16.mxu0 0
      %637 = vmatpush1.bf16.msra.mxu0 0
      %638 = vmatprep.subr.bf16.mxu0 0
      %639 = vmatpush1.bf16.msra.mxu0 0
      %640 = vmatprep.subr.bf16.mxu0 0
      %641 = vmatpush1.bf16.msra.mxu0 0
      %642 = vmatprep.subr.bf16.mxu0 0
      %643 = vmatpush1.bf16.msra.mxu0 0
      %644 = vmatprep.subr.bf16.mxu0 0
      %645 = vmatpush1.bf16.msra.mxu0 0
      %646 = vmatprep.subr.bf16.mxu0 0
      %647 = vmatpush1.bf16.msra.mxu0 0
      %648 = vmatprep.subr.bf16.mxu0 0
      %649 = vmatpush1.bf16.msra.mxu0 0
      %650 = vmatprep.subr.bf16.mxu0 %v631
      %651 = vmatpush1.bf16.msra.mxu0 %v628
      %652 = vmatprep.subr.bf16.mxu0 0
      %653 = vmatpush2.bf16.msra.mxu0 0
      %654 = vmatprep.subr.bf16.mxu0 0
      %655 = vmatpush2.bf16.msra.mxu0 0
      %656 = vmatprep.subr.bf16.mxu0 0
      %657 = vmatpush2.bf16.msra.mxu0 0
      %658 = vmatprep.subr.bf16.mxu0 0
      %659 = vmatpush2.bf16.msra.mxu0 0
      %660 = vmatprep.subr.bf16.mxu0 0
      %661 = vmatpush2.bf16.msra.mxu0 0
      %662 = vmatprep.subr.bf16.mxu0 0
      %663 = vmatpush2.bf16.msra.mxu0 0
      %664 = vmatprep.subr.bf16.mxu0 0
      %665 = vmatpush2.bf16.msra.mxu0 0
      %666 = vmatprep.subr.bf16.mxu0 0
      %667 = vmatpush2.bf16.msra.mxu0 0
      %668 = vmatprep.mubr.bf16.mxu0 0
      %669 = vmatmul.mubr.bf16.gmra.mxu0 %v625
      %v670 = vpop.f32.mrf.mxu0
      %v671 = vadd.f32 0.0, %v670
      %v672 = vpop.f32.mrf.mxu0
      %v673 = vadd.f32 0.0, %v672
      %v674 = vpop.f32.mrf.mxu0
      %v675 = vpop.f32.mrf.mxu0
      %676 = vdwg.mxu0
      %677 = vmatprep.subr.bf16.mxu0 0
      %678 = vmatpush1.bf16.msra.mxu0 0
      %679 = vmatprep.subr.bf16.mxu0 0
      %680 = vmatpush1.bf16.msra.mxu0 0
      %681 = vmatprep.subr.bf16.mxu0 0
      %682 = vmatpush1.bf16.msra.mxu0 0
      %683 = vmatprep.subr.bf16.mxu0 0
      %684 = vmatpush1.bf16.msra.mxu0 0
      %685 = vmatprep.subr.bf16.mxu0 0
      %686 = vmatpush1.bf16.msra.mxu0 0
      %687 = vmatprep.subr.bf16.mxu0 0
      %688 = vmatpush1.bf16.msra.mxu0 0
      %689 = vmatprep.subr.bf16.mxu0 0
      %690 = vmatpush1.bf16.msra.mxu0 0
      %691 = vmatprep.subr.bf16.mxu0 0
      %692 = vmatpush1.bf16.msra.mxu0 %v634
      %693 = vmatprep.subr.bf16.mxu0 0
      %694 = vmatpush2.bf16.msra.mxu0 0
      %695 = vmatprep.subr.bf16.mxu0 0
      %696 = vmatpush2.bf16.msra.mxu0 0
      %697 = vmatprep.subr.bf16.mxu0 0
      %698 = vmatpush2.bf16.msra.mxu0 0
      %699 = vmatprep.subr.bf16.mxu0 0
      %700 = vmatpush2.bf16.msra.mxu0 0
      %701 = vmatprep.subr.bf16.mxu0 0
      %702 = vmatpush2.bf16.msra.mxu0 0
      %703 = vmatprep.subr.bf16.mxu0 0
      %704 = vmatpush2.bf16.msra.mxu0 0
      %705 = vmatprep.subr.bf16.mxu0 0
      %706 = vmatpush2.bf16.msra.mxu0 0
      %707 = vmatprep.subr.bf16.mxu0 0
      %708 = vmatpush2.bf16.msra.mxu0 0
      %709 = vmatprep.mubr.bf16.mxu0 0
      %710 = vmatmul.mubr.bf16.gmra.mxu0 %v625
      %v711 = vpop.f32.mrf.mxu0
      %v712 = vadd.f32 0.0, %v711
      %v713 = vpop.f32.mrf.mxu0
      %v714 = vpop.f32.mrf.mxu0
      %v715 = vpop.f32.mrf.mxu0
      %716 = vdwg.mxu0
      %v717 = vadd.f32 %v563, %v671
      %v718 = vadd.f32 %v565, %v673
      %v719 = vadd.f32 %v604, %v712
      %v720 = vld [vmem:[%s1] sm:$0xf]
      %v722 = vunpack.c.l.b16 %v720
      %v723 = vpack.c.b16 %v722, %v722
      %724 = vrot.lane.b32.xlu0 %v723, 116
      %v725 = vpop.permute.xlu0 %724
      %726 = vrot.lane.b32.xlu0 %v403, 110
      %v727 = vpop.permute.xlu0 %726
      %728 = vrot.lane.b32.xlu0 %v411, 110
      %v729 = vpop.permute.xlu0 %728
      %730 = vrot.lane.b32.xlu0 %v410, 110
      %v731 = vpop.permute.xlu0 %730
      %vm732 = vcmask 900096
      %v733 = vsel %vm732, %v727, %v729
      %v734 = vsel %vm732, %v729, %v731
      %v736 = vsel %vm421, %v725, 0
      %v739 = vsel %vm425, %v733, 0
      %v742 = vsel %vm425, %v734, 0
      %v745 = vsel %vm425, %v731, 0
      %747 = vmatprep.subr.bf16.mxu0 0
      %748 = vmatpush1.bf16.msra.mxu0 0
      %749 = vmatprep.subr.bf16.mxu0 0
      %750 = vmatpush1.bf16.msra.mxu0 0
      %751 = vmatprep.subr.bf16.mxu0 0
      %752 = vmatpush1.bf16.msra.mxu0 0
      %753 = vmatprep.subr.bf16.mxu0 0
      %754 = vmatpush1.bf16.msra.mxu0 0
      %755 = vmatprep.subr.bf16.mxu0 0
      %756 = vmatpush1.bf16.msra.mxu0 0
      %757 = vmatprep.subr.bf16.mxu0 0
      %758 = vmatpush1.bf16.msra.mxu0 0
      %759 = vmatprep.subr.bf16.mxu0 0
      %760 = vmatpush1.bf16.msra.mxu0 0
      %761 = vmatprep.subr.bf16.mxu0 %v742
      %762 = vmatpush1.bf16.msra.mxu0 %v739
      %763 = vmatprep.subr.bf16.mxu0 0
      %764 = vmatpush2.bf16.msra.mxu0 0
      %765 = vmatprep.subr.bf16.mxu0 0
      %766 = vmatpush2.bf16.msra.mxu0 0
      %767 = vmatprep.subr.bf16.mxu0 0
      %768 = vmatpush2.bf16.msra.mxu0 0
      %769 = vmatprep.subr.bf16.mxu0 0
      %770 = vmatpush2.bf16.msra.mxu0 0
      %771 = vmatprep.subr.bf16.mxu0 0
      %772 = vmatpush2.bf16.msra.mxu0 0
      %773 = vmatprep.subr.bf16.mxu0 0
      %774 = vmatpush2.bf16.msra.mxu0 0
      %775 = vmatprep.subr.bf16.mxu0 0
      %776 = vmatpush2.bf16.msra.mxu0 0
      %777 = vmatprep.subr.bf16.mxu0 0
      %778 = vmatpush2.bf16.msra.mxu0 0
      %779 = vmatprep.mubr.bf16.mxu0 0
      %780 = vmatmul.mubr.bf16.gmra.mxu0 %v736
      %v781 = vpop.f32.mrf.mxu0
      %v782 = vadd.f32 0.0, %v781
      %v783 = vpop.f32.mrf.mxu0
      %v784 = vadd.f32 0.0, %v783
      %v785 = vpop.f32.mrf.mxu0
      %v786 = vpop.f32.mrf.mxu0
      %787 = vdwg.mxu0
      %788 = vmatprep.subr.bf16.mxu0 0
      %789 = vmatpush1.bf16.msra.mxu0 0
      %790 = vmatprep.subr.bf16.mxu0 0
      %791 = vmatpush1.bf16.msra.mxu0 0
      %792 = vmatprep.subr.bf16.mxu0 0
      %793 = vmatpush1.bf16.msra.mxu0 0
      %794 = vmatprep.subr.bf16.mxu0 0
      %795 = vmatpush1.bf16.msra.mxu0 0
      %796 = vmatprep.subr.bf16.mxu0 0
      %797 = vmatpush1.bf16.msra.mxu0 0
      %798 = vmatprep.subr.bf16.mxu0 0
      %799 = vmatpush1.bf16.msra.mxu0 0
      %800 = vmatprep.subr.bf16.mxu0 0
      %801 = vmatpush1.bf16.msra.mxu0 0
      %802 = vmatprep.subr.bf16.mxu0 0
      %803 = vmatpush1.bf16.msra.mxu0 %v745
      %804 = vmatprep.subr.bf16.mxu0 0
      %805 = vmatpush2.bf16.msra.mxu0 0
      %806 = vmatprep.subr.bf16.mxu0 0
      %807 = vmatpush2.bf16.msra.mxu0 0
      %808 = vmatprep.subr.bf16.mxu0 0
      %809 = vmatpush2.bf16.msra.mxu0 0
      %810 = vmatprep.subr.bf16.mxu0 0
      %811 = vmatpush2.bf16.msra.mxu0 0
      %812 = vmatprep.subr.bf16.mxu0 0
      %813 = vmatpush2.bf16.msra.mxu0 0
      %814 = vmatprep.subr.bf16.mxu0 0
      %815 = vmatpush2.bf16.msra.mxu0 0
      %816 = vmatprep.subr.bf16.mxu0 0
      %817 = vmatpush2.bf16.msra.mxu0 0
      %818 = vmatprep.subr.bf16.mxu0 0
      %819 = vmatpush2.bf16.msra.mxu0 0
      %820 = vmatprep.mubr.bf16.mxu0 0
      %821 = vmatmul.mubr.bf16.gmra.mxu0 %v736
      %v822 = vpop.f32.mrf.mxu0
      %v823 = vadd.f32 0.0, %v822
      %v824 = vpop.f32.mrf.mxu0
      %v825 = vpop.f32.mrf.mxu0
      %v826 = vpop.f32.mrf.mxu0
      %827 = vdwg.mxu0
      %v828 = vadd.f32 %v717, %v782
      %v829 = vadd.f32 %v718, %v784
      %v830 = vadd.f32 %v719, %v823
      %v831 = vld [vmem:[%s1] sm:$0xf]
      %v833 = vunpack.c.l.b16 %v831
      %v834 = vpack.c.b16 %v833, %v833
      %835 = vrot.lane.b32.xlu0 %v834, 112
      %v836 = vpop.permute.xlu0 %835
      %837 = vrot.lane.b32.xlu0 %v403, 109
      %v838 = vpop.permute.xlu0 %837
      %839 = vrot.lane.b32.xlu0 %v411, 109
      %v840 = vpop.permute.xlu0 %839
      %841 = vrot.lane.b32.xlu0 %v410, 109
      %v842 = vpop.permute.xlu0 %841
      %vm843 = vcmask 891904
      %v844 = vsel %vm843, %v838, %v840
      %v845 = vsel %vm843, %v840, %v842
      %v847 = vsel %vm421, %v836, 0
      %v850 = vsel %vm425, %v844, 0
      %v853 = vsel %vm425, %v845, 0
      %v856 = vsel %vm425, %v842, 0
      %858 = vmatprep.subr.bf16.mxu0 0
      %859 = vmatpush1.bf16.msra.mxu0 0
      %860 = vmatprep.subr.bf16.mxu0 0
      %861 = vmatpush1.bf16.msra.mxu0 0
      %862 = vmatprep.subr.bf16.mxu0 0
      %863 = vmatpush1.bf16.msra.mxu0 0
      %864 = vmatprep.subr.bf16.mxu0 0
      %865 = vmatpush1.bf16.msra.mxu0 0
      %866 = vmatprep.subr.bf16.mxu0 0
      %867 = vmatpush1.bf16.msra.mxu0 0
      %868 = vmatprep.subr.bf16.mxu0 0
      %869 = vmatpush1.bf16.msra.mxu0 0
      %870 = vmatprep.subr.bf16.mxu0 0
      %871 = vmatpush1.bf16.msra.mxu0 0
      %872 = vmatprep.subr.bf16.mxu0 %v853
      %873 = vmatpush1.bf16.msra.mxu0 %v850
      %874 = vmatprep.subr.bf16.mxu0 0
      %875 = vmatpush2.bf16.msra.mxu0 0
      %876 = vmatprep.subr.bf16.mxu0 0
      %877 = vmatpush2.bf16.msra.mxu0 0
      %878 = vmatprep.subr.bf16.mxu0 0
      %879 = vmatpush2.bf16.msra.mxu0 0
      %880 = vmatprep.subr.bf16.mxu0 0
      %881 = vmatpush2.bf16.msra.mxu0 0
      %882 = vmatprep.subr.bf16.mxu0 0
      %883 = vmatpush2.bf16.msra.mxu0 0
      %884 = vmatprep.subr.bf16.mxu0 0
      %885 = vmatpush2.bf16.msra.mxu0 0
      %886 = vmatprep.subr.bf16.mxu0 0
      %887 = vmatpush2.bf16.msra.mxu0 0
      %888 = vmatprep.subr.bf16.mxu0 0
      %889 = vmatpush2.bf16.msra.mxu0 0
      %890 = vmatprep.mubr.bf16.mxu0 0
      %891 = vmatmul.mubr.bf16.gmra.mxu0 %v847
      %v892 = vpop.f32.mrf.mxu0
      %v893 = vadd.f32 0.0, %v892
      %v894 = vpop.f32.mrf.mxu0
      %v895 = vadd.f32 0.0, %v894
      %v896 = vpop.f32.mrf.mxu0
      %v897 = vpop.f32.mrf.mxu0
      %898 = vdwg.mxu0
      %899 = vmatprep.subr.bf16.mxu0 0
      %900 = vmatpush1.bf16.msra.mxu0 0
      %901 = vmatprep.subr.bf16.mxu0 0
      %902 = vmatpush1.bf16.msra.mxu0 0
      %903 = vmatprep.subr.bf16.mxu0 0
      %904 = vmatpush1.bf16.msra.mxu0 0
      %905 = vmatprep.subr.bf16.mxu0 0
      %906 = vmatpush1.bf16.msra.mxu0 0
      %907 = vmatprep.subr.bf16.mxu0 0
      %908 = vmatpush1.bf16.msra.mxu0 0
      %909 = vmatprep.subr.bf16.mxu0 0
      %910 = vmatpush1.bf16.msra.mxu0 0
      %911 = vmatprep.subr.bf16.mxu0 0
      %912 = vmatpush1.bf16.msra.mxu0 0
      %913 = vmatprep.subr.bf16.mxu0 0
      %914 = vmatpush1.bf16.msra.mxu0 %v856
      %915 = vmatprep.subr.bf16.mxu0 0
      %916 = vmatpush2.bf16.msra.mxu0 0
      %917 = vmatprep.subr.bf16.mxu0 0
      %918 = vmatpush2.bf16.msra.mxu0 0
      %919 = vmatprep.subr.bf16.mxu0 0
      %920 = vmatpush2.bf16.msra.mxu0 0
      %921 = vmatprep.subr.bf16.mxu0 0
      %922 = vmatpush2.bf16.msra.mxu0 0
      %923 = vmatprep.subr.bf16.mxu0 0
      %924 = vmatpush2.bf16.msra.mxu0 0
      %925 = vmatprep.subr.bf16.mxu0 0
      %926 = vmatpush2.bf16.msra.mxu0 0
      %927 = vmatprep.subr.bf16.mxu0 0
      %928 = vmatpush2.bf16.msra.mxu0 0
      %929 = vmatprep.subr.bf16.mxu0 0
      %930 = vmatpush2.bf16.msra.mxu0 0
      %931 = vmatprep.mubr.bf16.mxu0 0
      %932 = vmatmul.mubr.bf16.gmra.mxu0 %v847
      %v933 = vpop.f32.mrf.mxu0
      %v934 = vadd.f32 0.0, %v933
      %v935 = vpop.f32.mrf.mxu0
      %v936 = vpop.f32.mrf.mxu0
      %v937 = vpop.f32.mrf.mxu0
      %938 = vdwg.mxu0
      %v939 = vadd.f32 %v828, %v893
      %v940 = vadd.f32 %v829, %v895
      %v941 = vadd.f32 %v830, %v934
      %v942 = vld [vmem:[%s1] sm:$0xf]
      %v944 = vunpack.c.l.b16 %v942
      %v945 = vpack.c.b16 %v944, %v944
      %946 = vrot.lane.b32.xlu0 %v945, 108
      %v947 = vpop.permute.xlu0 %946
      %948 = vrot.lane.b32.xlu0 %v403, 108
      %v949 = vpop.permute.xlu0 %948
      %950 = vrot.lane.b32.xlu0 %v411, 108
      %v951 = vpop.permute.xlu0 %950
      %952 = vrot.lane.b32.xlu0 %v410, 108
      %v953 = vpop.permute.xlu0 %952
      %vm954 = vcmask 883712
      %v955 = vsel %vm954, %v949, %v951
      %v956 = vsel %vm954, %v951, %v953
      %v958 = vsel %vm421, %v947, 0
      %v961 = vsel %vm425, %v955, 0
      %v964 = vsel %vm425, %v956, 0
      %v967 = vsel %vm425, %v953, 0
      %969 = vmatprep.subr.bf16.mxu0 0
      %970 = vmatpush1.bf16.msra.mxu0 0
      %971 = vmatprep.subr.bf16.mxu0 0
      %972 = vmatpush1.bf16.msra.mxu0 0
      %973 = vmatprep.subr.bf16.mxu0 0
      %974 = vmatpush1.bf16.msra.mxu0 0
      %975 = vmatprep.subr.bf16.mxu0 0
      %976 = vmatpush1.bf16.msra.mxu0 0
      %977 = vmatprep.subr.bf16.mxu0 0
      %978 = vmatpush1.bf16.msra.mxu0 0
      %979 = vmatprep.subr.bf16.mxu0 0
      %980 = vmatpush1.bf16.msra.mxu0 0
      %981 = vmatprep.subr.bf16.mxu0 0
      %982 = vmatpush1.bf16.msra.mxu0 0
      %983 = vmatprep.subr.bf16.mxu0 %v964
      %984 = vmatpush1.bf16.msra.mxu0 %v961
      %985 = vmatprep.subr.bf16.mxu0 0
      %986 = vmatpush2.bf16.msra.mxu0 0
      %987 = vmatprep.subr.bf16.mxu0 0
      %988 = vmatpush2.bf16.msra.mxu0 0
      %989 = vmatprep.subr.bf16.mxu0 0
      %990 = vmatpush2.bf16.msra.mxu0 0
      %991 = vmatprep.subr.bf16.mxu0 0
      %992 = vmatpush2.bf16.msra.mxu0 0
      %993 = vmatprep.subr.bf16.mxu0 0
      %994 = vmatpush2.bf16.msra.mxu0 0
      %995 = vmatprep.subr.bf16.mxu0 0
      %996 = vmatpush2.bf16.msra.mxu0 0
      %997 = vmatprep.subr.bf16.mxu0 0
      %998 = vmatpush2.bf16.msra.mxu0 0
      %999 = vmatprep.subr.bf16.mxu0 0
      %1000 = vmatpush2.bf16.msra.mxu0 0
      %1001 = vmatprep.mubr.bf16.mxu0 0
      %1002 = vmatmul.mubr.bf16.gmra.mxu0 %v958
      %v1003 = vpop.f32.mrf.mxu0
      %v1004 = vadd.f32 0.0, %v1003
      %v1005 = vpop.f32.mrf.mxu0
      %v1006 = vadd.f32 0.0, %v1005
      %v1007 = vpop.f32.mrf.mxu0
      %v1008 = vpop.f32.mrf.mxu0
      %1009 = vdwg.mxu0
      %1010 = vmatprep.subr.bf16.mxu0 0
      %1011 = vmatpush1.bf16.msra.mxu0 0
      %1012 = vmatprep.subr.bf16.mxu0 0
      %1013 = vmatpush1.bf16.msra.mxu0 0
      %1014 = vmatprep.subr.bf16.mxu0 0
      %1015 = vmatpush1.bf16.msra.mxu0 0
      %1016 = vmatprep.subr.bf16.mxu0 0
      %1017 = vmatpush1.bf16.msra.mxu0 0
      %1018 = vmatprep.subr.bf16.mxu0 0
      %1019 = vmatpush1.bf16.msra.mxu0 0
      %1020 = vmatprep.subr.bf16.mxu0 0
      %1021 = vmatpush1.bf16.msra.mxu0 0
      %1022 = vmatprep.subr.bf16.mxu0 0
      %1023 = vmatpush1.bf16.msra.mxu0 0
      %1024 = vmatprep.subr.bf16.mxu0 0
      %1025 = vmatpush1.bf16.msra.mxu0 %v967
      %1026 = vmatprep.subr.bf16.mxu0 0
      %1027 = vmatpush2.bf16.msra.mxu0 0
      %1028 = vmatprep.subr.bf16.mxu0 0
      %1029 = vmatpush2.bf16.msra.mxu0 0
      %1030 = vmatprep.subr.bf16.mxu0 0
      %1031 = vmatpush2.bf16.msra.mxu0 0
      %1032 = vmatprep.subr.bf16.mxu0 0
      %1033 = vmatpush2.bf16.msra.mxu0 0
      %1034 = vmatprep.subr.bf16.mxu0 0
      %1035 = vmatpush2.bf16.msra.mxu0 0
      %1036 = vmatprep.subr.bf16.mxu0 0
      %1037 = vmatpush2.bf16.msra.mxu0 0
      %1038 = vmatprep.subr.bf16.mxu0 0
      %1039 = vmatpush2.bf16.msra.mxu0 0
      %1040 = vmatprep.subr.bf16.mxu0 0
      %1041 = vmatpush2.bf16.msra.mxu0 0
      %1042 = vmatprep.mubr.bf16.mxu0 0
      %1043 = vmatmul.mubr.bf16.gmra.mxu0 %v958
      %v1044 = vpop.f32.mrf.mxu0
      %v1045 = vadd.f32 0.0, %v1044
      %v1046 = vpop.f32.mrf.mxu0
      %v1047 = vpop.f32.mrf.mxu0
      %v1048 = vpop.f32.mrf.mxu0
      %1049 = vdwg.mxu0
      %v1050 = vadd.f32 %v939, %v1004
      %v1051 = vadd.f32 %v940, %v1006
      %v1052 = vadd.f32 %v941, %v1045
      %v1053 = vld [vmem:[%s1] sm:$0xf]
      %v1055 = vunpack.c.l.b16 %v1053
      %v1056 = vpack.c.b16 %v1055, %v1055
      %1057 = vrot.lane.b32.xlu0 %v1056, 104
      %v1058 = vpop.permute.xlu0 %1057
      %1059 = vrot.lane.b32.xlu0 %v403, 92
      %v1060 = vpop.permute.xlu0 %1059
      %1061 = vrot.lane.b32.xlu0 %v411, 92
      %v1062 = vpop.permute.xlu0 %1061
      %1063 = vrot.lane.b32.xlu0 %v410, 92
      %v1064 = vpop.permute.xlu0 %1063
      %vm1065 = vcmask 752640
      %v1066 = vsel %vm1065, %v1060, %v1062
      %v1067 = vsel %vm1065, %v1062, %v1064
      %v1069 = vsel %vm421, %v1058, 0
      %v1072 = vsel %vm425, %v1066, 0
      %v1075 = vsel %vm425, %v1067, 0
      %v1078 = vsel %vm425, %v1064, 0
      %1080 = vmatprep.subr.bf16.mxu0 0
      %1081 = vmatpush1.bf16.msra.mxu0 0
      %1082 = vmatprep.subr.bf16.mxu0 0
      %1083 = vmatpush1.bf16.msra.mxu0 0
      %1084 = vmatprep.subr.bf16.mxu0 0
      %1085 = vmatpush1.bf16.msra.mxu0 0
      %1086 = vmatprep.subr.bf16.mxu0 0
      %1087 = vmatpush1.bf16.msra.mxu0 0
      %1088 = vmatprep.subr.bf16.mxu0 0
      %1089 = vmatpush1.bf16.msra.mxu0 0
      %1090 = vmatprep.subr.bf16.mxu0 0
      %1091 = vmatpush1.bf16.msra.mxu0 0
      %1092 = vmatprep.subr.bf16.mxu0 0
      %1093 = vmatpush1.bf16.msra.mxu0 0
      %1094 = vmatprep.subr.bf16.mxu0 %v1075
      %1095 = vmatpush1.bf16.msra.mxu0 %v1072
      %1096 = vmatprep.subr.bf16.mxu0 0
      %1097 = vmatpush2.bf16.msra.mxu0 0
      %1098 = vmatprep.subr.bf16.mxu0 0
      %1099 = vmatpush2.bf16.msra.mxu0 0
      %1100 = vmatprep.subr.bf16.mxu0 0
      %1101 = vmatpush2.bf16.msra.mxu0 0
      %1102 = vmatprep.subr.bf16.mxu0 0
      %1103 = vmatpush2.bf16.msra.mxu0 0
      %1104 = vmatprep.subr.bf16.mxu0 0
      %1105 = vmatpush2.bf16.msra.mxu0 0
      %1106 = vmatprep.subr.bf16.mxu0 0
      %1107 = vmatpush2.bf16.msra.mxu0 0
      %1108 = vmatprep.subr.bf16.mxu0 0
      %1109 = vmatpush2.bf16.msra.mxu0 0
      %1110 = vmatprep.subr.bf16.mxu0 0
      %1111 = vmatpush2.bf16.msra.mxu0 0
      %1112 = vmatprep.mubr.bf16.mxu0 0
      %1113 = vmatmul.mubr.bf16.gmra.mxu0 %v1069
      %v1114 = vpop.f32.mrf.mxu0
      %v1115 = vadd.f32 0.0, %v1114
      %v1116 = vpop.f32.mrf.mxu0
      %v1117 = vadd.f32 0.0, %v1116
      %v1118 = vpop.f32.mrf.mxu0
      %v1119 = vpop.f32.mrf.mxu0
      %1120 = vdwg.mxu0
      %1121 = vmatprep.subr.bf16.mxu0 0
      %1122 = vmatpush1.bf16.msra.mxu0 0
      %1123 = vmatprep.subr.bf16.mxu0 0
      %1124 = vmatpush1.bf16.msra.mxu0 0
      %1125 = vmatprep.subr.bf16.mxu0 0
      %1126 = vmatpush1.bf16.msra.mxu0 0
      %1127 = vmatprep.subr.bf16.mxu0 0
      %1128 = vmatpush1.bf16.msra.mxu0 0
      %1129 = vmatprep.subr.bf16.mxu0 0
      %1130 = vmatpush1.bf16.msra.mxu0 0
      %1131 = vmatprep.subr.bf16.mxu0 0
      %1132 = vmatpush1.bf16.msra.mxu0 0
      %1133 = vmatprep.subr.bf16.mxu0 0
      %1134 = vmatpush1.bf16.msra.mxu0 0
      %1135 = vmatprep.subr.bf16.mxu0 0
      %1136 = vmatpush1.bf16.msra.mxu0 %v1078
      %1137 = vmatprep.subr.bf16.mxu0 0
      %1138 = vmatpush2.bf16.msra.mxu0 0
      %1139 = vmatprep.subr.bf16.mxu0 0
      %1140 = vmatpush2.bf16.msra.mxu0 0
      %1141 = vmatprep.subr.bf16.mxu0 0
      %1142 = vmatpush2.bf16.msra.mxu0 0
      %1143 = vmatprep.subr.bf16.mxu0 0
      %1144 = vmatpush2.bf16.msra.mxu0 0
      %1145 = vmatprep.subr.bf16.mxu0 0
      %1146 = vmatpush2.bf16.msra.mxu0 0
      %1147 = vmatprep.subr.bf16.mxu0 0
      %1148 = vmatpush2.bf16.msra.mxu0 0
      %1149 = vmatprep.subr.bf16.mxu0 0
      %1150 = vmatpush2.bf16.msra.mxu0 0
      %1151 = vmatprep.subr.bf16.mxu0 0
      %1152 = vmatpush2.bf16.msra.mxu0 0
      %1153 = vmatprep.mubr.bf16.mxu0 0
      %1154 = vmatmul.mubr.bf16.gmra.mxu0 %v1069
      %v1155 = vpop.f32.mrf.mxu0
      %v1156 = vadd.f32 0.0, %v1155
      %v1157 = vpop.f32.mrf.mxu0
      %v1158 = vpop.f32.mrf.mxu0
      %v1159 = vpop.f32.mrf.mxu0
      %1160 = vdwg.mxu0
      %v1161 = vadd.f32 %v1050, %v1115
      %v1162 = vadd.f32 %v1051, %v1117
      %v1163 = vadd.f32 %v1052, %v1156
      %v1164 = vld [vmem:[%s1] sm:$0xf]
      %v1166 = vunpack.c.l.b16 %v1164
      %v1167 = vpack.c.b16 %v1166, %v1166
      %1168 = vrot.lane.b32.xlu0 %v1167, 100
      %v1169 = vpop.permute.xlu0 %1168
      %1170 = vrot.lane.b32.xlu0 %v403, 91
      %v1171 = vpop.permute.xlu0 %1170
      %1172 = vrot.lane.b32.xlu0 %v411, 91
      %v1173 = vpop.permute.xlu0 %1172
      %1174 = vrot.lane.b32.xlu0 %v410, 91
      %v1175 = vpop.permute.xlu0 %1174
      %vm1176 = vcmask 744448
      %v1177 = vsel %vm1176, %v1171, %v1173
      %v1178 = vsel %vm1176, %v1173, %v1175
      %v1180 = vsel %vm421, %v1169, 0
      %v1183 = vsel %vm425, %v1177, 0
      %v1186 = vsel %vm425, %v1178, 0
      %v1189 = vsel %vm425, %v1175, 0
      %1191 = vmatprep.subr.bf16.mxu0 0
      %1192 = vmatpush1.bf16.msra.mxu0 0
      %1193 = vmatprep.subr.bf16.mxu0 0
      %1194 = vmatpush1.bf16.msra.mxu0 0
      %1195 = vmatprep.subr.bf16.mxu0 0
      %1196 = vmatpush1.bf16.msra.mxu0 0
      %1197 = vmatprep.subr.bf16.mxu0 0
      %1198 = vmatpush1.bf16.msra.mxu0 0
      %1199 = vmatprep.subr.bf16.mxu0 0
      %1200 = vmatpush1.bf16.msra.mxu0 0
      %1201 = vmatprep.subr.bf16.mxu0 0
      %1202 = vmatpush1.bf16.msra.mxu0 0
      %1203 = vmatprep.subr.bf16.mxu0 0
      %1204 = vmatpush1.bf16.msra.mxu0 0
      %1205 = vmatprep.subr.bf16.mxu0 %v1186
      %1206 = vmatpush1.bf16.msra.mxu0 %v1183
      %1207 = vmatprep.subr.bf16.mxu0 0
      %1208 = vmatpush2.bf16.msra.mxu0 0
      %1209 = vmatprep.subr.bf16.mxu0 0
      %1210 = vmatpush2.bf16.msra.mxu0 0
      %1211 = vmatprep.subr.bf16.mxu0 0
      %1212 = vmatpush2.bf16.msra.mxu0 0
      %1213 = vmatprep.subr.bf16.mxu0 0
      %1214 = vmatpush2.bf16.msra.mxu0 0
      %1215 = vmatprep.subr.bf16.mxu0 0
      %1216 = vmatpush2.bf16.msra.mxu0 0
      %1217 = vmatprep.subr.bf16.mxu0 0
      %1218 = vmatpush2.bf16.msra.mxu0 0
      %1219 = vmatprep.subr.bf16.mxu0 0
      %1220 = vmatpush2.bf16.msra.mxu0 0
      %1221 = vmatprep.subr.bf16.mxu0 0
      %1222 = vmatpush2.bf16.msra.mxu0 0
      %1223 = vmatprep.mubr.bf16.mxu0 0
      %1224 = vmatmul.mubr.bf16.gmra.mxu0 %v1180
      %v1225 = vpop.f32.mrf.mxu0
      %v1226 = vadd.f32 0.0, %v1225
      %v1227 = vpop.f32.mrf.mxu0
      %v1228 = vadd.f32 0.0, %v1227
      %v1229 = vpop.f32.mrf.mxu0
      %v1230 = vpop.f32.mrf.mxu0
      %1231 = vdwg.mxu0
      %1232 = vmatprep.subr.bf16.mxu0 0
      %1233 = vmatpush1.bf16.msra.mxu0 0
      %1234 = vmatprep.subr.bf16.mxu0 0
      %1235 = vmatpush1.bf16.msra.mxu0 0
      %1236 = vmatprep.subr.bf16.mxu0 0
      %1237 = vmatpush1.bf16.msra.mxu0 0
      %1238 = vmatprep.subr.bf16.mxu0 0
      %1239 = vmatpush1.bf16.msra.mxu0 0
      %1240 = vmatprep.subr.bf16.mxu0 0
      %1241 = vmatpush1.bf16.msra.mxu0 0
      %1242 = vmatprep.subr.bf16.mxu0 0
      %1243 = vmatpush1.bf16.msra.mxu0 0
      %1244 = vmatprep.subr.bf16.mxu0 0
      %1245 = vmatpush1.bf16.msra.mxu0 0
      %1246 = vmatprep.subr.bf16.mxu0 0
      %1247 = vmatpush1.bf16.msra.mxu0 %v1189
      %1248 = vmatprep.subr.bf16.mxu0 0
      %1249 = vmatpush2.bf16.msra.mxu0 0
      %1250 = vmatprep.subr.bf16.mxu0 0
      %1251 = vmatpush2.bf16.msra.mxu0 0
      %1252 = vmatprep.subr.bf16.mxu0 0
      %1253 = vmatpush2.bf16.msra.mxu0 0
      %1254 = vmatprep.subr.bf16.mxu0 0
      %1255 = vmatpush2.bf16.msra.mxu0 0
      %1256 = vmatprep.subr.bf16.mxu0 0
      %1257 = vmatpush2.bf16.msra.mxu0 0
      %1258 = vmatprep.subr.bf16.mxu0 0
      %1259 = vmatpush2.bf16.msra.mxu0 0
      %1260 = vmatprep.subr.bf16.mxu0 0
      %1261 = vmatpush2.bf16.msra.mxu0 0
      %1262 = vmatprep.subr.bf16.mxu0 0
      %1263 = vmatpush2.bf16.msra.mxu0 0
      %1264 = vmatprep.mubr.bf16.mxu0 0
      %1265 = vmatmul.mubr.bf16.gmra.mxu0 %v1180
      %v1266 = vpop.f32.mrf.mxu0
      %v1267 = vadd.f32 0.0, %v1266
      %v1268 = vpop.f32.mrf.mxu0
      %v1269 = vpop.f32.mrf.mxu0
      %v1270 = vpop.f32.mrf.mxu0
      %1271 = vdwg.mxu0
      %v1272 = vadd.f32 %v1161, %v1226
      %v1273 = vadd.f32 %v1162, %v1228
      %v1274 = vadd.f32 %v1163, %v1267
      %v1275 = vld [vmem:[%s1] sm:$0xf]
      %v1277 = vunpack.c.l.b16 %v1275
      %v1278 = vpack.c.b16 %v1277, %v1277
      %1279 = vrot.lane.b32.xlu0 %v1278, 96
      %v1280 = vpop.permute.xlu0 %1279
      %1281 = vrot.lane.b32.xlu0 %v403, 90
      %v1282 = vpop.permute.xlu0 %1281
      %1283 = vrot.lane.b32.xlu0 %v411, 90
      %v1284 = vpop.permute.xlu0 %1283
      %1285 = vrot.lane.b32.xlu0 %v410, 90
      %v1286 = vpop.permute.xlu0 %1285
      %vm1287 = vcmask 736256
      %v1288 = vsel %vm1287, %v1282, %v1284
      %v1289 = vsel %vm1287, %v1284, %v1286
      %v1291 = vsel %vm421, %v1280, 0
      %v1294 = vsel %vm425, %v1288, 0
      %v1297 = vsel %vm425, %v1289, 0
      %v1300 = vsel %vm425, %v1286, 0
      %1302 = vmatprep.subr.bf16.mxu0 0
      %1303 = vmatpush1.bf16.msra.mxu0 0
      %1304 = vmatprep.subr.bf16.mxu0 0
      %1305 = vmatpush1.bf16.msra.mxu0 0
      %1306 = vmatprep.subr.bf16.mxu0 0
      %1307 = vmatpush1.bf16.msra.mxu0 0
      %1308 = vmatprep.subr.bf16.mxu0 0
      %1309 = vmatpush1.bf16.msra.mxu0 0
      %1310 = vmatprep.subr.bf16.mxu0 0
      %1311 = vmatpush1.bf16.msra.mxu0 0
      %1312 = vmatprep.subr.bf16.mxu0 0
      %1313 = vmatpush1.bf16.msra.mxu0 0
      %1314 = vmatprep.subr.bf16.mxu0 0
      %1315 = vmatpush1.bf16.msra.mxu0 0
      %1316 = vmatprep.subr.bf16.mxu0 %v1297
      %1317 = vmatpush1.bf16.msra.mxu0 %v1294
      %1318 = vmatprep.subr.bf16.mxu0 0
      %1319 = vmatpush2.bf16.msra.mxu0 0
      %1320 = vmatprep.subr.bf16.mxu0 0
      %1321 = vmatpush2.bf16.msra.mxu0 0
      %1322 = vmatprep.subr.bf16.mxu0 0
      %1323 = vmatpush2.bf16.msra.mxu0 0
      %1324 = vmatprep.subr.bf16.mxu0 0
      %1325 = vmatpush2.bf16.msra.mxu0 0
      %1326 = vmatprep.subr.bf16.mxu0 0
      %1327 = vmatpush2.bf16.msra.mxu0 0
      %1328 = vmatprep.subr.bf16.mxu0 0
      %1329 = vmatpush2.bf16.msra.mxu0 0
      %1330 = vmatprep.subr.bf16.mxu0 0
      %1331 = vmatpush2.bf16.msra.mxu0 0
      %1332 = vmatprep.subr.bf16.mxu0 0
      %1333 = vmatpush2.bf16.msra.mxu0 0
      %1334 = vmatprep.mubr.bf16.mxu0 0
      %1335 = vmatmul.mubr.bf16.gmra.mxu0 %v1291
      %v1336 = vpop.f32.mrf.mxu0
      %v1337 = vadd.f32 0.0, %v1336
      %v1338 = vpop.f32.mrf.mxu0
      %v1339 = vadd.f32 0.0, %v1338
      %v1340 = vpop.f32.mrf.mxu0
      %v1341 = vpop.f32.mrf.mxu0
      %1342 = vdwg.mxu0
      %1343 = vmatprep.subr.bf16.mxu0 0
      %1344 = vmatpush1.bf16.msra.mxu0 0
      %1345 = vmatprep.subr.bf16.mxu0 0
      %1346 = vmatpush1.bf16.msra.mxu0 0
      %1347 = vmatprep.subr.bf16.mxu0 0
      %1348 = vmatpush1.bf16.msra.mxu0 0
      %1349 = vmatprep.subr.bf16.mxu0 0
      %1350 = vmatpush1.bf16.msra.mxu0 0
      %1351 = vmatprep.subr.bf16.mxu0 0
      %1352 = vmatpush1.bf16.msra.mxu0 0
      %1353 = vmatprep.subr.bf16.mxu0 0
      %1354 = vmatpush1.bf16.msra.mxu0 0
      %1355 = vmatprep.subr.bf16.mxu0 0
      %1356 = vmatpush1.bf16.msra.mxu0 0
      %1357 = vmatprep.subr.bf16.mxu0 0
      %1358 = vmatpush1.bf16.msra.mxu0 %v1300
      %1359 = vmatprep.subr.bf16.mxu0 0
      %1360 = vmatpush2.bf16.msra.mxu0 0
      %1361 = vmatprep.subr.bf16.mxu0 0
      %1362 = vmatpush2.bf16.msra.mxu0 0
      %1363 = vmatprep.subr.bf16.mxu0 0
      %1364 = vmatpush2.bf16.msra.mxu0 0
      %1365 = vmatprep.subr.bf16.mxu0 0
      %1366 = vmatpush2.bf16.msra.mxu0 0
      %1367 = vmatprep.subr.bf16.mxu0 0
      %1368 = vmatpush2.bf16.msra.mxu0 0
      %1369 = vmatprep.subr.bf16.mxu0 0
      %1370 = vmatpush2.bf16.msra.mxu0 0
      %1371 = vmatprep.subr.bf16.mxu0 0
      %1372 = vmatpush2.bf16.msra.mxu0 0
      %1373 = vmatprep.subr.bf16.mxu0 0
      %1374 = vmatpush2.bf16.msra.mxu0 0
      %1375 = vmatprep.mubr.bf16.mxu0 0
      %1376 = vmatmul.mubr.bf16.gmra.mxu0 %v1291
      %v1377 = vpop.f32.mrf.mxu0
      %v1378 = vadd.f32 0.0, %v1377
      %v1379 = vpop.f32.mrf.mxu0
      %v1380 = vpop.f32.mrf.mxu0
      %v1381 = vpop.f32.mrf.mxu0
      %1382 = vdwg.mxu0
      %v1383 = vadd.f32 %v1272, %v1337
      %v1384 = vadd.f32 %v1273, %v1339
      %v1385 = vadd.f32 %v1274, %v1378
      %v1386 = vld [vmem:[%s2] sm:$0xff]
      %1388 = vset.pattern.permute.xlu0 0
      %1389 = vperm.xlu0 %1388, %v1386
      %v1390 = vpop.permute.xlu0 %1389
      %v1392 = vmul.f32 %v1383, %v1390
      %v1393 = vmul.f32 %v1384, %v1390
      %v1394 = vmul.f32 %v1385, %v1390
      %v1395 = vld [vmem:[%s3] sm:$0xff]
      %1397 = vset.pattern.permute.xlu0 0
      %1398 = vperm.xlu0 %1397, %v1395
      %v1399 = vpop.permute.xlu0 %1398
      %v1401 = vadd.f32 %v1392, %v1399
      %v1402 = vadd.f32 %v1393, %v1399
      %v1403 = vadd.f32 %v1394, %v1399
      %v1404 = vmax.f32 %v1401, 0.0
      %v1405 = vmax.f32 %v1402, 0.0
      %v1406 = vmax.f32 %v1403, 0.0
      %v1407 = vld [vmem:[%s7] sm:$0x7]
      %v1409 = vlaneseq
      %v1410 = vshrl.u32 %v1409, 7
      %v1411 = vsub.s32 0, %v1410
      %v1412 = vrot.slane %v1407, %v1411
      %v1413 = vlaneseq
      %v1414 = vshrl.u32 %v1413, 7
      %v1415 = vsub.s32 1, %v1414
      %v1416 = vrot.slane %v1407, %v1415
      %v1417 = vlaneseq
      %v1418 = vshrl.u32 %v1417, 7
      %v1419 = vsub.s32 2, %v1418
      %v1420 = vrot.slane %v1407, %v1419
      %v1424 = vmul.f32 %v1404, %v1412
      %v1425 = vmul.f32 %v1405, %v1416
      %v1426 = vmul.f32 %v1406, %v1420
      %vm1427 = vcmask 150528
      %1428 = vst.msk [vmem:[#allocation2] sm:$0xf] %vm1427, 0
      %vm1429 = vcmask 699800
      %1430 = vst.msk [vmem:[#allocation2 + $0x8] sm:$0xf] %vm1429, 0
      %v1431 = vpack.c.bf16 %v1424, %v1424
      %v1432 = vpack.c.bf16 %v1425, %v1425
      %v1433 = vpack.c.bf16 %v1426, %v1426
      %v1437 = vunpack.c.l.b16 %v1431
      %v1438 = vunpack.c.l.b16 %v1432
      %v1439 = vunpack.c.l.b16 %v1433
      %v1440 = vpack.c.b16 %v1438, %v1437
      %v1441 = vpack.c.b16 %v1439, %v1439
      %1442 = vrot.lane.b32.xlu0 %v1440, 19
      %v1443 = vpop.permute.xlu0 %1442
      %1444 = vrot.lane.b32.xlu0 %v1441, 19
      %v1445 = vpop.permute.xlu0 %1444
      %v1446 = vrot.slane %v1443, 4
      %vm1447 = vcmask 154624
      %v1448 = vsel %vm1447, %v1446, %v1443
      %v1449 = vsel %vm1447, %v1446, %v1445
      %vm1452 = vcmask 1043608
      %vm1453 = vcmask 1047556
      %vm1454 = vmor %vm1453, %vm1452
      %1455 = vst.msk [vmem:[#allocation2] sm:$0xff] %vm1454, %v1448
      %vm1456 = vcmask 412672
      %1457 = vst.msk [vmem:[#allocation2 + $0x8] sm:$0xf] %vm1456, %v1449
      %v1458 = vld [vmem:[#allocation2] sm:$0xff]
      %v1459 = vld [vmem:[#allocation2 + $0x8] sm:$0xf]
      %v1460 = vld [vmem:[%s4] sm:$0xf]
      %v1462 = vunpack.c.l.b16 %v1460
      %v1463 = vpack.c.b16 %v1462, %v1462
      %1464 = vrot.lane.b32.xlu0 %v1463, 120
      %v1465 = vpop.permute.xlu0 %1464
      %v1468 = vunpack.c.l.b16 %v1458
      %v1469 = vunpack.c.h.b16 %v1458
      %v1470 = vunpack.c.l.b16 %v1459
      %v1471 = vpack.c.b16 %v1468, %v1468
      %v1472 = vpack.c.b16 %v1469, %v1469
      %v1473 = vpack.c.b16 %v1470, %v1470
      %1474 = vrot.lane.b32.xlu0 %v1471, 127
      %v1475 = vpop.permute.xlu0 %1474
      %1476 = vrot.lane.b32.xlu0 %v1472, 127
      %v1477 = vpop.permute.xlu0 %1476
      %1478 = vrot.lane.b32.xlu0 %v1473, 127
      %v1479 = vpop.permute.xlu0 %1478
      %v1480 = vsel %vm418, %v1475, %v1477
      %v1481 = vsel %vm418, %v1477, %v1479
      %vm1482 = vcmask 64512
      %v1484 = vsel %vm1482, %v1465, 0
      %vm1486 = vcmask 1043456
      %v1488 = vsel %vm1486, %v1480, 0
      %v1491 = vsel %vm1486, %v1481, 0
      %v1494 = vsel %vm1486, %v1479, 0
      %1496 = vmatprep.subr.bf16.mxu0 0
      %1497 = vmatpush1.bf16.msra.mxu0 0
      %1498 = vmatprep.subr.bf16.mxu0 0
      %1499 = vmatpush1.bf16.msra.mxu0 0
      %1500 = vmatprep.subr.bf16.mxu0 0
      %1501 = vmatpush1.bf16.msra.mxu0 0
      %1502 = vmatprep.subr.bf16.mxu0 0
      %1503 = vmatpush1.bf16.msra.mxu0 0
      %1504 = vmatprep.subr.bf16.mxu0 0
      %1505 = vmatpush1.bf16.msra.mxu0 0
      %1506 = vmatprep.subr.bf16.mxu0 0
      %1507 = vmatpush1.bf16.msra.mxu0 0
      %1508 = vmatprep.subr.bf16.mxu0 0
      %1509 = vmatpush1.bf16.msra.mxu0 0
      %1510 = vmatprep.subr.bf16.mxu0 %v1491
      %1511 = vmatpush1.bf16.msra.mxu0 %v1488
      %1512 = vmatprep.subr.bf16.mxu0 0
      %1513 = vmatpush2.bf16.msra.mxu0 0
      %1514 = vmatprep.subr.bf16.mxu0 0
      %1515 = vmatpush2.bf16.msra.mxu0 0
      %1516 = vmatprep.subr.bf16.mxu0 0
      %1517 = vmatpush2.bf16.msra.mxu0 0
      %1518 = vmatprep.subr.bf16.mxu0 0
      %1519 = vmatpush2.bf16.msra.mxu0 0
      %1520 = vmatprep.subr.bf16.mxu0 0
      %1521 = vmatpush2.bf16.msra.mxu0 0
      %1522 = vmatprep.subr.bf16.mxu0 0
      %1523 = vmatpush2.bf16.msra.mxu0 0
      %1524 = vmatprep.subr.bf16.mxu0 0
      %1525 = vmatpush2.bf16.msra.mxu0 0
      %1526 = vmatprep.subr.bf16.mxu0 0
      %1527 = vmatpush2.bf16.msra.mxu0 0
      %1528 = vmatprep.mubr.bf16.mxu0 0
      %1529 = vmatmul.mubr.bf16.gmra.mxu0 %v1484
      %v1530 = vpop.f32.mrf.mxu0
      %v1531 = vadd.f32 0.0, %v1530
      %v1532 = vpop.f32.mrf.mxu0
      %v1533 = vadd.f32 0.0, %v1532
      %v1534 = vpop.f32.mrf.mxu0
      %v1535 = vpop.f32.mrf.mxu0
      %1536 = vdwg.mxu0
      %1537 = vmatprep.subr.bf16.mxu0 0
      %1538 = vmatpush1.bf16.msra.mxu0 0
      %1539 = vmatprep.subr.bf16.mxu0 0
      %1540 = vmatpush1.bf16.msra.mxu0 0
      %1541 = vmatprep.subr.bf16.mxu0 0
      %1542 = vmatpush1.bf16.msra.mxu0 0
      %1543 = vmatprep.subr.bf16.mxu0 0
      %1544 = vmatpush1.bf16.msra.mxu0 0
      %1545 = vmatprep.subr.bf16.mxu0 0
      %1546 = vmatpush1.bf16.msra.mxu0 0
      %1547 = vmatprep.subr.bf16.mxu0 0
      %1548 = vmatpush1.bf16.msra.mxu0 0
      %1549 = vmatprep.subr.bf16.mxu0 0
      %1550 = vmatpush1.bf16.msra.mxu0 0
      %1551 = vmatprep.subr.bf16.mxu0 0
      %1552 = vmatpush1.bf16.msra.mxu0 %v1494
      %1553 = vmatprep.subr.bf16.mxu0 0
      %1554 = vmatpush2.bf16.msra.mxu0 0
      %1555 = vmatprep.subr.bf16.mxu0 0
      %1556 = vmatpush2.bf16.msra.mxu0 0
      %1557 = vmatprep.subr.bf16.mxu0 0
      %1558 = vmatpush2.bf16.msra.mxu0 0
      %1559 = vmatprep.subr.bf16.mxu0 0
      %1560 = vmatpush2.bf16.msra.mxu0 0
      %1561 = vmatprep.subr.bf16.mxu0 0
      %1562 = vmatpush2.bf16.msra.mxu0 0
      %1563 = vmatprep.subr.bf16.mxu0 0
      %1564 = vmatpush2.bf16.msra.mxu0 0
      %1565 = vmatprep.subr.bf16.mxu0 0
      %1566 = vmatpush2.bf16.msra.mxu0 0
      %1567 = vmatprep.subr.bf16.mxu0 0
      %1568 = vmatpush2.bf16.msra.mxu0 0
      %1569 = vmatprep.mubr.bf16.mxu0 0
      %1570 = vmatmul.mubr.bf16.gmra.mxu0 %v1484
      %v1571 = vpop.f32.mrf.mxu0
      %v1572 = vadd.f32 0.0, %v1571
      %v1573 = vpop.f32.mrf.mxu0
      %v1574 = vpop.f32.mrf.mxu0
      %v1575 = vpop.f32.mrf.mxu0
      %1576 = vdwg.mxu0
      %v1578 = vsel %vm1482, %v1460, 0
      %v1581 = vsel %vm1486, %v1471, 0
      %v1584 = vsel %vm1486, %v1472, 0
      %v1587 = vsel %vm1486, %v1473, 0
      %1589 = vmatprep.subr.bf16.mxu0 0
      %1590 = vmatpush1.bf16.msra.mxu0 0
      %1591 = vmatprep.subr.bf16.mxu0 0
      %1592 = vmatpush1.bf16.msra.mxu0 0
      %1593 = vmatprep.subr.bf16.mxu0 0
      %1594 = vmatpush1.bf16.msra.mxu0 0
      %1595 = vmatprep.subr.bf16.mxu0 0
      %1596 = vmatpush1.bf16.msra.mxu0 0
      %1597 = vmatprep.subr.bf16.mxu0 0
      %1598 = vmatpush1.bf16.msra.mxu0 0
      %1599 = vmatprep.subr.bf16.mxu0 0
      %1600 = vmatpush1.bf16.msra.mxu0 0
      %1601 = vmatprep.subr.bf16.mxu0 0
      %1602 = vmatpush1.bf16.msra.mxu0 0
      %1603 = vmatprep.subr.bf16.mxu0 %v1584
      %1604 = vmatpush1.bf16.msra.mxu0 %v1581
      %1605 = vmatprep.subr.bf16.mxu0 0
      %1606 = vmatpush2.bf16.msra.mxu0 0
      %1607 = vmatprep.subr.bf16.mxu0 0
      %1608 = vmatpush2.bf16.msra.mxu0 0
      %1609 = vmatprep.subr.bf16.mxu0 0
      %1610 = vmatpush2.bf16.msra.mxu0 0
      %1611 = vmatprep.subr.bf16.mxu0 0
      %1612 = vmatpush2.bf16.msra.mxu0 0
      %1613 = vmatprep.subr.bf16.mxu0 0
      %1614 = vmatpush2.bf16.msra.mxu0 0
      %1615 = vmatprep.subr.bf16.mxu0 0
      %1616 = vmatpush2.bf16.msra.mxu0 0
      %1617 = vmatprep.subr.bf16.mxu0 0
      %1618 = vmatpush2.bf16.msra.mxu0 0
      %1619 = vmatprep.subr.bf16.mxu0 0
      %1620 = vmatpush2.bf16.msra.mxu0 0
      %1621 = vmatprep.mubr.bf16.mxu0 0
      %1622 = vmatmul.mubr.bf16.gmra.mxu0 %v1578
      %v1623 = vpop.f32.mrf.mxu0
      %v1624 = vadd.f32 %v1531, %v1623
      %v1625 = vpop.f32.mrf.mxu0
      %v1626 = vadd.f32 %v1533, %v1625
      %v1627 = vpop.f32.mrf.mxu0
      %v1628 = vpop.f32.mrf.mxu0
      %1629 = vdwg.mxu0
      %1630 = vmatprep.subr.bf16.mxu0 0
      %1631 = vmatpush1.bf16.msra.mxu0 0
      %1632 = vmatprep.subr.bf16.mxu0 0
      %1633 = vmatpush1.bf16.msra.mxu0 0
      %1634 = vmatprep.subr.bf16.mxu0 0
      %1635 = vmatpush1.bf16.msra.mxu0 0
      %1636 = vmatprep.subr.bf16.mxu0 0
      %1637 = vmatpush1.bf16.msra.mxu0 0
      %1638 = vmatprep.subr.bf16.mxu0 0
      %1639 = vmatpush1.bf16.msra.mxu0 0
      %1640 = vmatprep.subr.bf16.mxu0 0
      %1641 = vmatpush1.bf16.msra.mxu0 0
      %1642 = vmatprep.subr.bf16.mxu0 0
      %1643 = vmatpush1.bf16.msra.mxu0 0
      %1644 = vmatprep.subr.bf16.mxu0 0
      %1645 = vmatpush1.bf16.msra.mxu0 %v1587
      %1646 = vmatprep.subr.bf16.mxu0 0
      %1647 = vmatpush2.bf16.msra.mxu0 0
      %1648 = vmatprep.subr.bf16.mxu0 0
      %1649 = vmatpush2.bf16.msra.mxu0 0
      %1650 = vmatprep.subr.bf16.mxu0 0
      %1651 = vmatpush2.bf16.msra.mxu0 0
      %1652 = vmatprep.subr.bf16.mxu0 0
      %1653 = vmatpush2.bf16.msra.mxu0 0
      %1654 = vmatprep.subr.bf16.mxu0 0
      %1655 = vmatpush2.bf16.msra.mxu0 0
      %1656 = vmatprep.subr.bf16.mxu0 0
      %1657 = vmatpush2.bf16.msra.mxu0 0
      %1658 = vmatprep.subr.bf16.mxu0 0
      %1659 = vmatpush2.bf16.msra.mxu0 0
      %1660 = vmatprep.subr.bf16.mxu0 0
      %1661 = vmatpush2.bf16.msra.mxu0 0
      %1662 = vmatprep.mubr.bf16.mxu0 0
      %1663 = vmatmul.mubr.bf16.gmra.mxu0 %v1578
      %v1664 = vpop.f32.mrf.mxu0
      %v1665 = vadd.f32 %v1572, %v1664
      %v1666 = vpop.f32.mrf.mxu0
      %v1667 = vpop.f32.mrf.mxu0
      %v1668 = vpop.f32.mrf.mxu0
      %1669 = vdwg.mxu0
      %1670 = vrot.lane.b32.xlu0 %v1463, 112
      %v1671 = vpop.permute.xlu0 %1670
      %1672 = vrot.lane.b32.xlu0 %v1471, 126
      %v1673 = vpop.permute.xlu0 %1672
      %1674 = vrot.lane.b32.xlu0 %v1472, 126
      %v1675 = vpop.permute.xlu0 %1674
      %1676 = vrot.lane.b32.xlu0 %v1473, 126
      %v1677 = vpop.permute.xlu0 %1676
      %v1678 = vsel %vm621, %v1673, %v1675
      %v1679 = vsel %vm621, %v1675, %v1677
      %v1681 = vsel %vm1482, %v1671, 0
      %v1684 = vsel %vm1486, %v1678, 0
      %v1687 = vsel %vm1486, %v1679, 0
      %v1690 = vsel %vm1486, %v1677, 0
      %1692 = vmatprep.subr.bf16.mxu0 0
      %1693 = vmatpush1.bf16.msra.mxu0 0
      %1694 = vmatprep.subr.bf16.mxu0 0
      %1695 = vmatpush1.bf16.msra.mxu0 0
      %1696 = vmatprep.subr.bf16.mxu0 0
      %1697 = vmatpush1.bf16.msra.mxu0 0
      %1698 = vmatprep.subr.bf16.mxu0 0
      %1699 = vmatpush1.bf16.msra.mxu0 0
      %1700 = vmatprep.subr.bf16.mxu0 0
      %1701 = vmatpush1.bf16.msra.mxu0 0
      %1702 = vmatprep.subr.bf16.mxu0 0
      %1703 = vmatpush1.bf16.msra.mxu0 0
      %1704 = vmatprep.subr.bf16.mxu0 0
      %1705 = vmatpush1.bf16.msra.mxu0 0
      %1706 = vmatprep.subr.bf16.mxu0 %v1687
      %1707 = vmatpush1.bf16.msra.mxu0 %v1684
      %1708 = vmatprep.subr.bf16.mxu0 0
      %1709 = vmatpush2.bf16.msra.mxu0 0
      %1710 = vmatprep.subr.bf16.mxu0 0
      %1711 = vmatpush2.bf16.msra.mxu0 0
      %1712 = vmatprep.subr.bf16.mxu0 0
      %1713 = vmatpush2.bf16.msra.mxu0 0
      %1714 = vmatprep.subr.bf16.mxu0 0
      %1715 = vmatpush2.bf16.msra.mxu0 0
      %1716 = vmatprep.subr.bf16.mxu0 0
      %1717 = vmatpush2.bf16.msra.mxu0 0
      %1718 = vmatprep.subr.bf16.mxu0 0
      %1719 = vmatpush2.bf16.msra.mxu0 0
      %1720 = vmatprep.subr.bf16.mxu0 0
      %1721 = vmatpush2.bf16.msra.mxu0 0
      %1722 = vmatprep.subr.bf16.mxu0 0
      %1723 = vmatpush2.bf16.msra.mxu0 0
      %1724 = vmatprep.mubr.bf16.mxu0 0
      %1725 = vmatmul.mubr.bf16.gmra.mxu0 %v1681
      %v1726 = vpop.f32.mrf.mxu0
      %v1727 = vadd.f32 0.0, %v1726
      %v1728 = vpop.f32.mrf.mxu0
      %v1729 = vadd.f32 0.0, %v1728
      %v1730 = vpop.f32.mrf.mxu0
      %v1731 = vpop.f32.mrf.mxu0
      %1732 = vdwg.mxu0
      %1733 = vmatprep.subr.bf16.mxu0 0
      %1734 = vmatpush1.bf16.msra.mxu0 0
      %1735 = vmatprep.subr.bf16.mxu0 0
      %1736 = vmatpush1.bf16.msra.mxu0 0
      %1737 = vmatprep.subr.bf16.mxu0 0
      %1738 = vmatpush1.bf16.msra.mxu0 0
      %1739 = vmatprep.subr.bf16.mxu0 0
      %1740 = vmatpush1.bf16.msra.mxu0 0
      %1741 = vmatprep.subr.bf16.mxu0 0
      %1742 = vmatpush1.bf16.msra.mxu0 0
      %1743 = vmatprep.subr.bf16.mxu0 0
      %1744 = vmatpush1.bf16.msra.mxu0 0
      %1745 = vmatprep.subr.bf16.mxu0 0
      %1746 = vmatpush1.bf16.msra.mxu0 0
      %1747 = vmatprep.subr.bf16.mxu0 0
      %1748 = vmatpush1.bf16.msra.mxu0 %v1690
      %1749 = vmatprep.subr.bf16.mxu0 0
      %1750 = vmatpush2.bf16.msra.mxu0 0
      %1751 = vmatprep.subr.bf16.mxu0 0
      %1752 = vmatpush2.bf16.msra.mxu0 0
      %1753 = vmatprep.subr.bf16.mxu0 0
      %1754 = vmatpush2.bf16.msra.mxu0 0
      %1755 = vmatprep.subr.bf16.mxu0 0
      %1756 = vmatpush2.bf16.msra.mxu0 0
      %1757 = vmatprep.subr.bf16.mxu0 0
      %1758 = vmatpush2.bf16.msra.mxu0 0
      %1759 = vmatprep.subr.bf16.mxu0 0
      %1760 = vmatpush2.bf16.msra.mxu0 0
      %1761 = vmatprep.subr.bf16.mxu0 0
      %1762 = vmatpush2.bf16.msra.mxu0 0
      %1763 = vmatprep.subr.bf16.mxu0 0
      %1764 = vmatpush2.bf16.msra.mxu0 0
      %1765 = vmatprep.mubr.bf16.mxu0 0
      %1766 = vmatmul.mubr.bf16.gmra.mxu0 %v1681
      %v1767 = vpop.f32.mrf.mxu0
      %v1768 = vadd.f32 0.0, %v1767
      %v1769 = vpop.f32.mrf.mxu0
      %v1770 = vpop.f32.mrf.mxu0
      %v1771 = vpop.f32.mrf.mxu0
      %1772 = vdwg.mxu0
      %v1773 = vadd.f32 %v1624, %v1727
      %v1774 = vadd.f32 %v1626, %v1729
      %v1775 = vadd.f32 %v1665, %v1768
      %1776 = vrot.lane.b32.xlu0 %v1463, 104
      %v1777 = vpop.permute.xlu0 %1776
      %1778 = vrot.lane.b32.xlu0 %v1471, 110
      %v1779 = vpop.permute.xlu0 %1778
      %1780 = vrot.lane.b32.xlu0 %v1472, 110
      %v1781 = vpop.permute.xlu0 %1780
      %1782 = vrot.lane.b32.xlu0 %v1473, 110
      %v1783 = vpop.permute.xlu0 %1782
      %v1784 = vsel %vm732, %v1779, %v1781
      %v1785 = vsel %vm732, %v1781, %v1783
      %v1787 = vsel %vm1482, %v1777, 0
      %v1790 = vsel %vm1486, %v1784, 0
      %v1793 = vsel %vm1486, %v1785, 0
      %v1796 = vsel %vm1486, %v1783, 0
      %1798 = vmatprep.subr.bf16.mxu0 0
      %1799 = vmatpush1.bf16.msra.mxu0 0
      %1800 = vmatprep.subr.bf16.mxu0 0
      %1801 = vmatpush1.bf16.msra.mxu0 0
      %1802 = vmatprep.subr.bf16.mxu0 0
      %1803 = vmatpush1.bf16.msra.mxu0 0
      %1804 = vmatprep.subr.bf16.mxu0 0
      %1805 = vmatpush1.bf16.msra.mxu0 0
      %1806 = vmatprep.subr.bf16.mxu0 0
      %1807 = vmatpush1.bf16.msra.mxu0 0
      %1808 = vmatprep.subr.bf16.mxu0 0
      %1809 = vmatpush1.bf16.msra.mxu0 0
      %1810 = vmatprep.subr.bf16.mxu0 0
      %1811 = vmatpush1.bf16.msra.mxu0 0
      %1812 = vmatprep.subr.bf16.mxu0 %v1793
      %1813 = vmatpush1.bf16.msra.mxu0 %v1790
      %1814 = vmatprep.subr.bf16.mxu0 0
      %1815 = vmatpush2.bf16.msra.mxu0 0
      %1816 = vmatprep.subr.bf16.mxu0 0
      %1817 = vmatpush2.bf16.msra.mxu0 0
      %1818 = vmatprep.subr.bf16.mxu0 0
      %1819 = vmatpush2.bf16.msra.mxu0 0
      %1820 = vmatprep.subr.bf16.mxu0 0
      %1821 = vmatpush2.bf16.msra.mxu0 0
      %1822 = vmatprep.subr.bf16.mxu0 0
      %1823 = vmatpush2.bf16.msra.mxu0 0
      %1824 = vmatprep.subr.bf16.mxu0 0
      %1825 = vmatpush2.bf16.msra.mxu0 0
      %1826 = vmatprep.subr.bf16.mxu0 0
      %1827 = vmatpush2.bf16.msra.mxu0 0
      %1828 = vmatprep.subr.bf16.mxu0 0
      %1829 = vmatpush2.bf16.msra.mxu0 0
      %1830 = vmatprep.mubr.bf16.mxu0 0
      %1831 = vmatmul.mubr.bf16.gmra.mxu0 %v1787
      %v1832 = vpop.f32.mrf.mxu0
      %v1833 = vadd.f32 0.0, %v1832
      %v1834 = vpop.f32.mrf.mxu0
      %v1835 = vadd.f32 0.0, %v1834
      %v1836 = vpop.f32.mrf.mxu0
      %v1837 = vpop.f32.mrf.mxu0
      %1838 = vdwg.mxu0
      %1839 = vmatprep.subr.bf16.mxu0 0
      %1840 = vmatpush1.bf16.msra.mxu0 0
      %1841 = vmatprep.subr.bf16.mxu0 0
      %1842 = vmatpush1.bf16.msra.mxu0 0
      %1843 = vmatprep.subr.bf16.mxu0 0
      %1844 = vmatpush1.bf16.msra.mxu0 0
      %1845 = vmatprep.subr.bf16.mxu0 0
      %1846 = vmatpush1.bf16.msra.mxu0 0
      %1847 = vmatprep.subr.bf16.mxu0 0
      %1848 = vmatpush1.bf16.msra.mxu0 0
      %1849 = vmatprep.subr.bf16.mxu0 0
      %1850 = vmatpush1.bf16.msra.mxu0 0
      %1851 = vmatprep.subr.bf16.mxu0 0
      %1852 = vmatpush1.bf16.msra.mxu0 0
      %1853 = vmatprep.subr.bf16.mxu0 0
      %1854 = vmatpush1.bf16.msra.mxu0 %v1796
      %1855 = vmatprep.subr.bf16.mxu0 0
      %1856 = vmatpush2.bf16.msra.mxu0 0
      %1857 = vmatprep.subr.bf16.mxu0 0
      %1858 = vmatpush2.bf16.msra.mxu0 0
      %1859 = vmatprep.subr.bf16.mxu0 0
      %1860 = vmatpush2.bf16.msra.mxu0 0
      %1861 = vmatprep.subr.bf16.mxu0 0
      %1862 = vmatpush2.bf16.msra.mxu0 0
      %1863 = vmatprep.subr.bf16.mxu0 0
      %1864 = vmatpush2.bf16.msra.mxu0 0
      %1865 = vmatprep.subr.bf16.mxu0 0
      %1866 = vmatpush2.bf16.msra.mxu0 0
      %1867 = vmatprep.subr.bf16.mxu0 0
      %1868 = vmatpush2.bf16.msra.mxu0 0
      %1869 = vmatprep.subr.bf16.mxu0 0
      %1870 = vmatpush2.bf16.msra.mxu0 0
      %1871 = vmatprep.mubr.bf16.mxu0 0
      %1872 = vmatmul.mubr.bf16.gmra.mxu0 %v1787
      %v1873 = vpop.f32.mrf.mxu0
      %v1874 = vadd.f32 0.0, %v1873
      %v1875 = vpop.f32.mrf.mxu0
      %v1876 = vpop.f32.mrf.mxu0
      %v1877 = vpop.f32.mrf.mxu0
      %1878 = vdwg.mxu0
      %v1879 = vadd.f32 %v1773, %v1833
      %v1880 = vadd.f32 %v1774, %v1835
      %v1881 = vadd.f32 %v1775, %v1874
      %1882 = vrot.lane.b32.xlu0 %v1463, 96
      %v1883 = vpop.permute.xlu0 %1882
      %1884 = vrot.lane.b32.xlu0 %v1471, 109
      %v1885 = vpop.permute.xlu0 %1884
      %1886 = vrot.lane.b32.xlu0 %v1472, 109
      %v1887 = vpop.permute.xlu0 %1886
      %1888 = vrot.lane.b32.xlu0 %v1473, 109
      %v1889 = vpop.permute.xlu0 %1888
      %v1890 = vsel %vm843, %v1885, %v1887
      %v1891 = vsel %vm843, %v1887, %v1889
      %v1893 = vsel %vm1482, %v1883, 0
      %v1896 = vsel %vm1486, %v1890, 0
      %v1899 = vsel %vm1486, %v1891, 0
      %v1902 = vsel %vm1486, %v1889, 0
      %1904 = vmatprep.subr.bf16.mxu0 0
      %1905 = vmatpush1.bf16.msra.mxu0 0
      %1906 = vmatprep.subr.bf16.mxu0 0
      %1907 = vmatpush1.bf16.msra.mxu0 0
      %1908 = vmatprep.subr.bf16.mxu0 0
      %1909 = vmatpush1.bf16.msra.mxu0 0
      %1910 = vmatprep.subr.bf16.mxu0 0
      %1911 = vmatpush1.bf16.msra.mxu0 0
      %1912 = vmatprep.subr.bf16.mxu0 0
      %1913 = vmatpush1.bf16.msra.mxu0 0
      %1914 = vmatprep.subr.bf16.mxu0 0
      %1915 = vmatpush1.bf16.msra.mxu0 0
      %1916 = vmatprep.subr.bf16.mxu0 0
      %1917 = vmatpush1.bf16.msra.mxu0 0
      %1918 = vmatprep.subr.bf16.mxu0 %v1899
      %1919 = vmatpush1.bf16.msra.mxu0 %v1896
      %1920 = vmatprep.subr.bf16.mxu0 0
      %1921 = vmatpush2.bf16.msra.mxu0 0
      %1922 = vmatprep.subr.bf16.mxu0 0
      %1923 = vmatpush2.bf16.msra.mxu0 0
      %1924 = vmatprep.subr.bf16.mxu0 0
      %1925 = vmatpush2.bf16.msra.mxu0 0
      %1926 = vmatprep.subr.bf16.mxu0 0
      %1927 = vmatpush2.bf16.msra.mxu0 0
      %1928 = vmatprep.subr.bf16.mxu0 0
      %1929 = vmatpush2.bf16.msra.mxu0 0
      %1930 = vmatprep.subr.bf16.mxu0 0
      %1931 = vmatpush2.bf16.msra.mxu0 0
      %1932 = vmatprep.subr.bf16.mxu0 0
      %1933 = vmatpush2.bf16.msra.mxu0 0
      %1934 = vmatprep.subr.bf16.mxu0 0
      %1935 = vmatpush2.bf16.msra.mxu0 0
      %1936 = vmatprep.mubr.bf16.mxu0 0
      %1937 = vmatmul.mubr.bf16.gmra.mxu0 %v1893
      %v1938 = vpop.f32.mrf.mxu0
      %v1939 = vadd.f32 0.0, %v1938
      %v1940 = vpop.f32.mrf.mxu0
      %v1941 = vadd.f32 0.0, %v1940
      %v1942 = vpop.f32.mrf.mxu0
      %v1943 = vpop.f32.mrf.mxu0
      %1944 = vdwg.mxu0
      %1945 = vmatprep.subr.bf16.mxu0 0
      %1946 = vmatpush1.bf16.msra.mxu0 0
      %1947 = vmatprep.subr.bf16.mxu0 0
      %1948 = vmatpush1.bf16.msra.mxu0 0
      %1949 = vmatprep.subr.bf16.mxu0 0
      %1950 = vmatpush1.bf16.msra.mxu0 0
      %1951 = vmatprep.subr.bf16.mxu0 0
      %1952 = vmatpush1.bf16.msra.mxu0 0
      %1953 = vmatprep.subr.bf16.mxu0 0
      %1954 = vmatpush1.bf16.msra.mxu0 0
      %1955 = vmatprep.subr.bf16.mxu0 0
      %1956 = vmatpush1.bf16.msra.mxu0 0
      %1957 = vmatprep.subr.bf16.mxu0 0
      %1958 = vmatpush1.bf16.msra.mxu0 0
      %1959 = vmatprep.subr.bf16.mxu0 0
      %1960 = vmatpush1.bf16.msra.mxu0 %v1902
      %1961 = vmatprep.subr.bf16.mxu0 0
      %1962 = vmatpush2.bf16.msra.mxu0 0
      %1963 = vmatprep.subr.bf16.mxu0 0
      %1964 = vmatpush2.bf16.msra.mxu0 0
      %1965 = vmatprep.subr.bf16.mxu0 0
      %1966 = vmatpush2.bf16.msra.mxu0 0
      %1967 = vmatprep.subr.bf16.mxu0 0
      %1968 = vmatpush2.bf16.msra.mxu0 0
      %1969 = vmatprep.subr.bf16.mxu0 0
      %1970 = vmatpush2.bf16.msra.mxu0 0
      %1971 = vmatprep.subr.bf16.mxu0 0
      %1972 = vmatpush2.bf16.msra.mxu0 0
      %1973 = vmatprep.subr.bf16.mxu0 0
      %1974 = vmatpush2.bf16.msra.mxu0 0
      %1975 = vmatprep.subr.bf16.mxu0 0
      %1976 = vmatpush2.bf16.msra.mxu0 0
      %1977 = vmatprep.mubr.bf16.mxu0 0
      %1978 = vmatmul.mubr.bf16.gmra.mxu0 %v1893
      %v1979 = vpop.f32.mrf.mxu0
      %v1980 = vadd.f32 0.0, %v1979
      %v1981 = vpop.f32.mrf.mxu0
      %v1982 = vpop.f32.mrf.mxu0
      %v1983 = vpop.f32.mrf.mxu0
      %1984 = vdwg.mxu0
      %v1985 = vadd.f32 %v1879, %v1939
      %v1986 = vadd.f32 %v1880, %v1941
      %v1987 = vadd.f32 %v1881, %v1980
      %1988 = vrot.lane.b32.xlu0 %v1463, 88
      %v1989 = vpop.permute.xlu0 %1988
      %1990 = vrot.lane.b32.xlu0 %v1471, 108
      %v1991 = vpop.permute.xlu0 %1990
      %1992 = vrot.lane.b32.xlu0 %v1472, 108
      %v1993 = vpop.permute.xlu0 %1992
      %1994 = vrot.lane.b32.xlu0 %v1473, 108
      %v1995 = vpop.permute.xlu0 %1994
      %v1996 = vsel %vm954, %v1991, %v1993
      %v1997 = vsel %vm954, %v1993, %v1995
      %v1999 = vsel %vm1482, %v1989, 0
      %v2002 = vsel %vm1486, %v1996, 0
      %v2005 = vsel %vm1486, %v1997, 0
      %v2008 = vsel %vm1486, %v1995, 0
      %2010 = vmatprep.subr.bf16.mxu0 0
      %2011 = vmatpush1.bf16.msra.mxu0 0
      %2012 = vmatprep.subr.bf16.mxu0 0
      %2013 = vmatpush1.bf16.msra.mxu0 0
      %2014 = vmatprep.subr.bf16.mxu0 0
      %2015 = vmatpush1.bf16.msra.mxu0 0
      %2016 = vmatprep.subr.bf16.mxu0 0
      %2017 = vmatpush1.bf16.msra.mxu0 0
      %2018 = vmatprep.subr.bf16.mxu0 0
      %2019 = vmatpush1.bf16.msra.mxu0 0
      %2020 = vmatprep.subr.bf16.mxu0 0
      %2021 = vmatpush1.bf16.msra.mxu0 0
      %2022 = vmatprep.subr.bf16.mxu0 0
      %2023 = vmatpush1.bf16.msra.mxu0 0
      %2024 = vmatprep.subr.bf16.mxu0 %v2005
      %2025 = vmatpush1.bf16.msra.mxu0 %v2002
      %2026 = vmatprep.subr.bf16.mxu0 0
      %2027 = vmatpush2.bf16.msra.mxu0 0
      %2028 = vmatprep.subr.bf16.mxu0 0
      %2029 = vmatpush2.bf16.msra.mxu0 0
      %2030 = vmatprep.subr.bf16.mxu0 0
      %2031 = vmatpush2.bf16.msra.mxu0 0
      %2032 = vmatprep.subr.bf16.mxu0 0
      %2033 = vmatpush2.bf16.msra.mxu0 0
      %2034 = vmatprep.subr.bf16.mxu0 0
      %2035 = vmatpush2.bf16.msra.mxu0 0
      %2036 = vmatprep.subr.bf16.mxu0 0
      %2037 = vmatpush2.bf16.msra.mxu0 0
      %2038 = vmatprep.subr.bf16.mxu0 0
      %2039 = vmatpush2.bf16.msra.mxu0 0
      %2040 = vmatprep.subr.bf16.mxu0 0
      %2041 = vmatpush2.bf16.msra.mxu0 0
      %2042 = vmatprep.mubr.bf16.mxu0 0
      %2043 = vmatmul.mubr.bf16.gmra.mxu0 %v1999
      %v2044 = vpop.f32.mrf.mxu0
      %v2045 = vadd.f32 0.0, %v2044
      %v2046 = vpop.f32.mrf.mxu0
      %v2047 = vadd.f32 0.0, %v2046
      %v2048 = vpop.f32.mrf.mxu0
      %v2049 = vpop.f32.mrf.mxu0
      %2050 = vdwg.mxu0
      %2051 = vmatprep.subr.bf16.mxu0 0
      %2052 = vmatpush1.bf16.msra.mxu0 0
      %2053 = vmatprep.subr.bf16.mxu0 0
      %2054 = vmatpush1.bf16.msra.mxu0 0
      %2055 = vmatprep.subr.bf16.mxu0 0
      %2056 = vmatpush1.bf16.msra.mxu0 0
      %2057 = vmatprep.subr.bf16.mxu0 0
      %2058 = vmatpush1.bf16.msra.mxu0 0
      %2059 = vmatprep.subr.bf16.mxu0 0
      %2060 = vmatpush1.bf16.msra.mxu0 0
      %2061 = vmatprep.subr.bf16.mxu0 0
      %2062 = vmatpush1.bf16.msra.mxu0 0
      %2063 = vmatprep.subr.bf16.mxu0 0
      %2064 = vmatpush1.bf16.msra.mxu0 0
      %2065 = vmatprep.subr.bf16.mxu0 0
      %2066 = vmatpush1.bf16.msra.mxu0 %v2008
      %2067 = vmatprep.subr.bf16.mxu0 0
      %2068 = vmatpush2.bf16.msra.mxu0 0
      %2069 = vmatprep.subr.bf16.mxu0 0
      %2070 = vmatpush2.bf16.msra.mxu0 0
      %2071 = vmatprep.subr.bf16.mxu0 0
      %2072 = vmatpush2.bf16.msra.mxu0 0
      %2073 = vmatprep.subr.bf16.mxu0 0
      %2074 = vmatpush2.bf16.msra.mxu0 0
      %2075 = vmatprep.subr.bf16.mxu0 0
      %2076 = vmatpush2.bf16.msra.mxu0 0
      %2077 = vmatprep.subr.bf16.mxu0 0
      %2078 = vmatpush2.bf16.msra.mxu0 0
      %2079 = vmatprep.subr.bf16.mxu0 0
      %2080 = vmatpush2.bf16.msra.mxu0 0
      %2081 = vmatprep.subr.bf16.mxu0 0
      %2082 = vmatpush2.bf16.msra.mxu0 0
      %2083 = vmatprep.mubr.bf16.mxu0 0
      %2084 = vmatmul.mubr.bf16.gmra.mxu0 %v1999
      %v2085 = vpop.f32.mrf.mxu0
      %v2086 = vadd.f32 0.0, %v2085
      %v2087 = vpop.f32.mrf.mxu0
      %v2088 = vpop.f32.mrf.mxu0
      %v2089 = vpop.f32.mrf.mxu0
      %2090 = vdwg.mxu0
      %v2091 = vadd.f32 %v1985, %v2045
      %v2092 = vadd.f32 %v1986, %v2047
      %v2093 = vadd.f32 %v1987, %v2086
      %2094 = vrot.lane.b32.xlu0 %v1463, 80
      %v2095 = vpop.permute.xlu0 %2094
      %2096 = vrot.lane.b32.xlu0 %v1471, 92
      %v2097 = vpop.permute.xlu0 %2096
      %2098 = vrot.lane.b32.xlu0 %v1472, 92
      %v2099 = vpop.permute.xlu0 %2098
      %2100 = vrot.lane.b32.xlu0 %v1473, 92
      %v2101 = vpop.permute.xlu0 %2100
      %v2102 = vsel %vm1065, %v2097, %v2099
      %v2103 = vsel %vm1065, %v2099, %v2101
      %v2105 = vsel %vm1482, %v2095, 0
      %v2108 = vsel %vm1486, %v2102, 0
      %v2111 = vsel %vm1486, %v2103, 0
      %v2114 = vsel %vm1486, %v2101, 0
      %2116 = vmatprep.subr.bf16.mxu0 0
      %2117 = vmatpush1.bf16.msra.mxu0 0
      %2118 = vmatprep.subr.bf16.mxu0 0
      %2119 = vmatpush1.bf16.msra.mxu0 0
      %2120 = vmatprep.subr.bf16.mxu0 0
      %2121 = vmatpush1.bf16.msra.mxu0 0
      %2122 = vmatprep.subr.bf16.mxu0 0
      %2123 = vmatpush1.bf16.msra.mxu0 0
      %2124 = vmatprep.subr.bf16.mxu0 0
      %2125 = vmatpush1.bf16.msra.mxu0 0
      %2126 = vmatprep.subr.bf16.mxu0 0
      %2127 = vmatpush1.bf16.msra.mxu0 0
      %2128 = vmatprep.subr.bf16.mxu0 0
      %2129 = vmatpush1.bf16.msra.mxu0 0
      %2130 = vmatprep.subr.bf16.mxu0 %v2111
      %2131 = vmatpush1.bf16.msra.mxu0 %v2108
      %2132 = vmatprep.subr.bf16.mxu0 0
      %2133 = vmatpush2.bf16.msra.mxu0 0
      %2134 = vmatprep.subr.bf16.mxu0 0
      %2135 = vmatpush2.bf16.msra.mxu0 0
      %2136 = vmatprep.subr.bf16.mxu0 0
      %2137 = vmatpush2.bf16.msra.mxu0 0
      %2138 = vmatprep.subr.bf16.mxu0 0
      %2139 = vmatpush2.bf16.msra.mxu0 0
      %2140 = vmatprep.subr.bf16.mxu0 0
      %2141 = vmatpush2.bf16.msra.mxu0 0
      %2142 = vmatprep.subr.bf16.mxu0 0
      %2143 = vmatpush2.bf16.msra.mxu0 0
      %2144 = vmatprep.subr.bf16.mxu0 0
      %2145 = vmatpush2.bf16.msra.mxu0 0
      %2146 = vmatprep.subr.bf16.mxu0 0
      %2147 = vmatpush2.bf16.msra.mxu0 0
      %2148 = vmatprep.mubr.bf16.mxu0 0
      %2149 = vmatmul.mubr.bf16.gmra.mxu0 %v2105
      %v2150 = vpop.f32.mrf.mxu0
      %v2151 = vadd.f32 0.0, %v2150
      %v2152 = vpop.f32.mrf.mxu0
      %v2153 = vadd.f32 0.0, %v2152
      %v2154 = vpop.f32.mrf.mxu0
      %v2155 = vpop.f32.mrf.mxu0
      %2156 = vdwg.mxu0
      %2157 = vmatprep.subr.bf16.mxu0 0
      %2158 = vmatpush1.bf16.msra.mxu0 0
      %2159 = vmatprep.subr.bf16.mxu0 0
      %2160 = vmatpush1.bf16.msra.mxu0 0
      %2161 = vmatprep.subr.bf16.mxu0 0
      %2162 = vmatpush1.bf16.msra.mxu0 0
      %2163 = vmatprep.subr.bf16.mxu0 0
      %2164 = vmatpush1.bf16.msra.mxu0 0
      %2165 = vmatprep.subr.bf16.mxu0 0
      %2166 = vmatpush1.bf16.msra.mxu0 0
      %2167 = vmatprep.subr.bf16.mxu0 0
      %2168 = vmatpush1.bf16.msra.mxu0 0
      %2169 = vmatprep.subr.bf16.mxu0 0
      %2170 = vmatpush1.bf16.msra.mxu0 0
      %2171 = vmatprep.subr.bf16.mxu0 0
      %2172 = vmatpush1.bf16.msra.mxu0 %v2114
      %2173 = vmatprep.subr.bf16.mxu0 0
      %2174 = vmatpush2.bf16.msra.mxu0 0
      %2175 = vmatprep.subr.bf16.mxu0 0
      %2176 = vmatpush2.bf16.msra.mxu0 0
      %2177 = vmatprep.subr.bf16.mxu0 0
      %2178 = vmatpush2.bf16.msra.mxu0 0
      %2179 = vmatprep.subr.bf16.mxu0 0
      %2180 = vmatpush2.bf16.msra.mxu0 0
      %2181 = vmatprep.subr.bf16.mxu0 0
      %2182 = vmatpush2.bf16.msra.mxu0 0
      %2183 = vmatprep.subr.bf16.mxu0 0
      %2184 = vmatpush2.bf16.msra.mxu0 0
      %2185 = vmatprep.subr.bf16.mxu0 0
      %2186 = vmatpush2.bf16.msra.mxu0 0
      %2187 = vmatprep.subr.bf16.mxu0 0
      %2188 = vmatpush2.bf16.msra.mxu0 0
      %2189 = vmatprep.mubr.bf16.mxu0 0
      %2190 = vmatmul.mubr.bf16.gmra.mxu0 %v2105
      %v2191 = vpop.f32.mrf.mxu0
      %v2192 = vadd.f32 0.0, %v2191
      %v2193 = vpop.f32.mrf.mxu0
      %v2194 = vpop.f32.mrf.mxu0
      %v2195 = vpop.f32.mrf.mxu0
      %2196 = vdwg.mxu0
      %v2197 = vadd.f32 %v2091, %v2151
      %v2198 = vadd.f32 %v2092, %v2153
      %v2199 = vadd.f32 %v2093, %v2192
      %2200 = vrot.lane.b32.xlu0 %v1463, 72
      %v2201 = vpop.permute.xlu0 %2200
      %2202 = vrot.lane.b32.xlu0 %v1471, 91
      %v2203 = vpop.permute.xlu0 %2202
      %2204 = vrot.lane.b32.xlu0 %v1472, 91
      %v2205 = vpop.permute.xlu0 %2204
      %2206 = vrot.lane.b32.xlu0 %v1473, 91
      %v2207 = vpop.permute.xlu0 %2206
      %v2208 = vsel %vm1176, %v2203, %v2205
      %v2209 = vsel %vm1176, %v2205, %v2207
      %v2211 = vsel %vm1482, %v2201, 0
      %v2214 = vsel %vm1486, %v2208, 0
      %v2217 = vsel %vm1486, %v2209, 0
      %v2220 = vsel %vm1486, %v2207, 0
      %2222 = vmatprep.subr.bf16.mxu0 0
      %2223 = vmatpush1.bf16.msra.mxu0 0
      %2224 = vmatprep.subr.bf16.mxu0 0
      %2225 = vmatpush1.bf16.msra.mxu0 0
      %2226 = vmatprep.subr.bf16.mxu0 0
      %2227 = vmatpush1.bf16.msra.mxu0 0
      %2228 = vmatprep.subr.bf16.mxu0 0
      %2229 = vmatpush1.bf16.msra.mxu0 0
      %2230 = vmatprep.subr.bf16.mxu0 0
      %2231 = vmatpush1.bf16.msra.mxu0 0
      %2232 = vmatprep.subr.bf16.mxu0 0
      %2233 = vmatpush1.bf16.msra.mxu0 0
      %2234 = vmatprep.subr.bf16.mxu0 0
      %2235 = vmatpush1.bf16.msra.mxu0 0
      %2236 = vmatprep.subr.bf16.mxu0 %v2217
      %2237 = vmatpush1.bf16.msra.mxu0 %v2214
      %2238 = vmatprep.subr.bf16.mxu0 0
      %2239 = vmatpush2.bf16.msra.mxu0 0
      %2240 = vmatprep.subr.bf16.mxu0 0
      %2241 = vmatpush2.bf16.msra.mxu0 0
      %2242 = vmatprep.subr.bf16.mxu0 0
      %2243 = vmatpush2.bf16.msra.mxu0 0
      %2244 = vmatprep.subr.bf16.mxu0 0
      %2245 = vmatpush2.bf16.msra.mxu0 0
      %2246 = vmatprep.subr.bf16.mxu0 0
      %2247 = vmatpush2.bf16.msra.mxu0 0
      %2248 = vmatprep.subr.bf16.mxu0 0
      %2249 = vmatpush2.bf16.msra.mxu0 0
      %2250 = vmatprep.subr.bf16.mxu0 0
      %2251 = vmatpush2.bf16.msra.mxu0 0
      %2252 = vmatprep.subr.bf16.mxu0 0
      %2253 = vmatpush2.bf16.msra.mxu0 0
      %2254 = vmatprep.mubr.bf16.mxu0 0
      %2255 = vmatmul.mubr.bf16.gmra.mxu0 %v2211
      %v2256 = vpop.f32.mrf.mxu0
      %v2257 = vadd.f32 0.0, %v2256
      %v2258 = vpop.f32.mrf.mxu0
      %v2259 = vadd.f32 0.0, %v2258
      %v2260 = vpop.f32.mrf.mxu0
      %v2261 = vpop.f32.mrf.mxu0
      %2262 = vdwg.mxu0
      %2263 = vmatprep.subr.bf16.mxu0 0
      %2264 = vmatpush1.bf16.msra.mxu0 0
      %2265 = vmatprep.subr.bf16.mxu0 0
      %2266 = vmatpush1.bf16.msra.mxu0 0
      %2267 = vmatprep.subr.bf16.mxu0 0
      %2268 = vmatpush1.bf16.msra.mxu0 0
      %2269 = vmatprep.subr.bf16.mxu0 0
      %2270 = vmatpush1.bf16.msra.mxu0 0
      %2271 = vmatprep.subr.bf16.mxu0 0
      %2272 = vmatpush1.bf16.msra.mxu0 0
      %2273 = vmatprep.subr.bf16.mxu0 0
      %2274 = vmatpush1.bf16.msra.mxu0 0
      %2275 = vmatprep.subr.bf16.mxu0 0
      %2276 = vmatpush1.bf16.msra.mxu0 0
      %2277 = vmatprep.subr.bf16.mxu0 0
      %2278 = vmatpush1.bf16.msra.mxu0 %v2220
      %2279 = vmatprep.subr.bf16.mxu0 0
      %2280 = vmatpush2.bf16.msra.mxu0 0
      %2281 = vmatprep.subr.bf16.mxu0 0
      %2282 = vmatpush2.bf16.msra.mxu0 0
      %2283 = vmatprep.subr.bf16.mxu0 0
      %2284 = vmatpush2.bf16.msra.mxu0 0
      %2285 = vmatprep.subr.bf16.mxu0 0
      %2286 = vmatpush2.bf16.msra.mxu0 0
      %2287 = vmatprep.subr.bf16.mxu0 0
      %2288 = vmatpush2.bf16.msra.mxu0 0
      %2289 = vmatprep.subr.bf16.mxu0 0
      %2290 = vmatpush2.bf16.msra.mxu0 0
      %2291 = vmatprep.subr.bf16.mxu0 0
      %2292 = vmatpush2.bf16.msra.mxu0 0
      %2293 = vmatprep.subr.bf16.mxu0 0
      %2294 = vmatpush2.bf16.msra.mxu0 0
      %2295 = vmatprep.mubr.bf16.mxu0 0
      %2296 = vmatmul.mubr.bf16.gmra.mxu0 %v2211
      %v2297 = vpop.f32.mrf.mxu0
      %v2298 = vadd.f32 0.0, %v2297
      %v2299 = vpop.f32.mrf.mxu0
      %v2300 = vpop.f32.mrf.mxu0
      %v2301 = vpop.f32.mrf.mxu0
      %2302 = vdwg.mxu0
      %v2303 = vadd.f32 %v2197, %v2257
      %v2304 = vadd.f32 %v2198, %v2259
      %v2305 = vadd.f32 %v2199, %v2298
      %2306 = vrot.lane.b32.xlu0 %v1463, 64
      %v2307 = vpop.permute.xlu0 %2306
      %2308 = vrot.lane.b32.xlu0 %v1471, 90
      %v2309 = vpop.permute.xlu0 %2308
      %2310 = vrot.lane.b32.xlu0 %v1472, 90
      %v2311 = vpop.permute.xlu0 %2310
      %2312 = vrot.lane.b32.xlu0 %v1473, 90
      %v2313 = vpop.permute.xlu0 %2312
      %v2314 = vsel %vm1287, %v2309, %v2311
      %v2315 = vsel %vm1287, %v2311, %v2313
      %v2317 = vsel %vm1482, %v2307, 0
      %v2320 = vsel %vm1486, %v2314, 0
      %v2323 = vsel %vm1486, %v2315, 0
      %v2326 = vsel %vm1486, %v2313, 0
      %2328 = vmatprep.subr.bf16.mxu0 0
      %2329 = vmatpush1.bf16.msra.mxu0 0
      %2330 = vmatprep.subr.bf16.mxu0 0
      %2331 = vmatpush1.bf16.msra.mxu0 0
      %2332 = vmatprep.subr.bf16.mxu0 0
      %2333 = vmatpush1.bf16.msra.mxu0 0
      %2334 = vmatprep.subr.bf16.mxu0 0
      %2335 = vmatpush1.bf16.msra.mxu0 0
      %2336 = vmatprep.subr.bf16.mxu0 0
      %2337 = vmatpush1.bf16.msra.mxu0 0
      %2338 = vmatprep.subr.bf16.mxu0 0
      %2339 = vmatpush1.bf16.msra.mxu0 0
      %2340 = vmatprep.subr.bf16.mxu0 0
      %2341 = vmatpush1.bf16.msra.mxu0 0
      %2342 = vmatprep.subr.bf16.mxu0 %v2323
      %2343 = vmatpush1.bf16.msra.mxu0 %v2320
      %2344 = vmatprep.subr.bf16.mxu0 0
      %2345 = vmatpush2.bf16.msra.mxu0 0
      %2346 = vmatprep.subr.bf16.mxu0 0
      %2347 = vmatpush2.bf16.msra.mxu0 0
      %2348 = vmatprep.subr.bf16.mxu0 0
      %2349 = vmatpush2.bf16.msra.mxu0 0
      %2350 = vmatprep.subr.bf16.mxu0 0
      %2351 = vmatpush2.bf16.msra.mxu0 0
      %2352 = vmatprep.subr.bf16.mxu0 0
      %2353 = vmatpush2.bf16.msra.mxu0 0
      %2354 = vmatprep.subr.bf16.mxu0 0
      %2355 = vmatpush2.bf16.msra.mxu0 0
      %2356 = vmatprep.subr.bf16.mxu0 0
      %2357 = vmatpush2.bf16.msra.mxu0 0
      %2358 = vmatprep.subr.bf16.mxu0 0
      %2359 = vmatpush2.bf16.msra.mxu0 0
      %2360 = vmatprep.mubr.bf16.mxu0 0
      %2361 = vmatmul.mubr.bf16.gmra.mxu0 %v2317
      %v2362 = vpop.f32.mrf.mxu0
      %v2363 = vadd.f32 0.0, %v2362
      %v2364 = vpop.f32.mrf.mxu0
      %v2365 = vadd.f32 0.0, %v2364
      %v2366 = vpop.f32.mrf.mxu0
      %v2367 = vpop.f32.mrf.mxu0
      %2368 = vdwg.mxu0
      %2369 = vmatprep.subr.bf16.mxu0 0
      %2370 = vmatpush1.bf16.msra.mxu0 0
      %2371 = vmatprep.subr.bf16.mxu0 0
      %2372 = vmatpush1.bf16.msra.mxu0 0
      %2373 = vmatprep.subr.bf16.mxu0 0
      %2374 = vmatpush1.bf16.msra.mxu0 0
      %2375 = vmatprep.subr.bf16.mxu0 0
      %2376 = vmatpush1.bf16.msra.mxu0 0
      %2377 = vmatprep.subr.bf16.mxu0 0
      %2378 = vmatpush1.bf16.msra.mxu0 0
      %2379 = vmatprep.subr.bf16.mxu0 0
      %2380 = vmatpush1.bf16.msra.mxu0 0
      %2381 = vmatprep.subr.bf16.mxu0 0
      %2382 = vmatpush1.bf16.msra.mxu0 0
      %2383 = vmatprep.subr.bf16.mxu0 0
      %2384 = vmatpush1.bf16.msra.mxu0 %v2326
      %2385 = vmatprep.subr.bf16.mxu0 0
      %2386 = vmatpush2.bf16.msra.mxu0 0
      %2387 = vmatprep.subr.bf16.mxu0 0
      %2388 = vmatpush2.bf16.msra.mxu0 0
      %2389 = vmatprep.subr.bf16.mxu0 0
      %2390 = vmatpush2.bf16.msra.mxu0 0
      %2391 = vmatprep.subr.bf16.mxu0 0
      %2392 = vmatpush2.bf16.msra.mxu0 0
      %2393 = vmatprep.subr.bf16.mxu0 0
      %2394 = vmatpush2.bf16.msra.mxu0 0
      %2395 = vmatprep.subr.bf16.mxu0 0
      %2396 = vmatpush2.bf16.msra.mxu0 0
      %2397 = vmatprep.subr.bf16.mxu0 0
      %2398 = vmatpush2.bf16.msra.mxu0 0
      %2399 = vmatprep.subr.bf16.mxu0 0
      %2400 = vmatpush2.bf16.msra.mxu0 0
      %2401 = vmatprep.mubr.bf16.mxu0 0
      %2402 = vmatmul.mubr.bf16.gmra.mxu0 %v2317
      %v2403 = vpop.f32.mrf.mxu0
      %v2404 = vadd.f32 0.0, %v2403
      %v2405 = vpop.f32.mrf.mxu0
      %v2406 = vpop.f32.mrf.mxu0
      %v2407 = vpop.f32.mrf.mxu0
      %2408 = vdwg.mxu0
      %v2409 = vadd.f32 %v2303, %v2363
      %v2410 = vadd.f32 %v2304, %v2365
      %v2411 = vadd.f32 %v2305, %v2404
      %v2412 = vld [vmem:[%s5] sm:$0xff]
      %2414 = vset.pattern.permute.xlu0 0
      %2415 = vperm.xlu0 %2414, %v2412
      %v2416 = vpop.permute.xlu0 %2415
      %v2418 = vmul.f32 %v2409, %v2416
      %v2419 = vmul.f32 %v2410, %v2416
      %v2420 = vmul.f32 %v2411, %v2416
      %v2421 = vld [vmem:[%s6] sm:$0xff]
      %2423 = vset.pattern.permute.xlu0 0
      %2424 = vperm.xlu0 %2423, %v2421
      %v2425 = vpop.permute.xlu0 %2424
      %v2427 = vadd.f32 %v2418, %v2425
      %v2428 = vadd.f32 %v2419, %v2425
      %v2429 = vadd.f32 %v2420, %v2425
      %v2430 = vld [vmem:[%s8] sm:$0xf]
      %v2432 = vsel %vm421, %v2430, 0
      %2434 = vmatprep.subr.bf16.mxu0 0
      %2435 = vmatpush1.bf16.msra.mxu0 0
      %2436 = vmatprep.subr.bf16.mxu0 0
      %2437 = vmatpush1.bf16.msra.mxu0 0
      %2438 = vmatprep.subr.bf16.mxu0 0
      %2439 = vmatpush1.bf16.msra.mxu0 0
      %2440 = vmatprep.subr.bf16.mxu0 0
      %2441 = vmatpush1.bf16.msra.mxu0 0
      %2442 = vmatprep.subr.bf16.mxu0 0
      %2443 = vmatpush1.bf16.msra.mxu0 0
      %2444 = vmatprep.subr.bf16.mxu0 0
      %2445 = vmatpush1.bf16.msra.mxu0 0
      %2446 = vmatprep.subr.bf16.mxu0 0
      %2447 = vmatpush1.bf16.msra.mxu0 0
      %2448 = vmatprep.subr.bf16.mxu0 %v853
      %2449 = vmatpush1.bf16.msra.mxu0 %v850
      %2450 = vmatprep.subr.bf16.mxu0 0
      %2451 = vmatpush2.bf16.msra.mxu0 0
      %2452 = vmatprep.subr.bf16.mxu0 0
      %2453 = vmatpush2.bf16.msra.mxu0 0
      %2454 = vmatprep.subr.bf16.mxu0 0
      %2455 = vmatpush2.bf16.msra.mxu0 0
      %2456 = vmatprep.subr.bf16.mxu0 0
      %2457 = vmatpush2.bf16.msra.mxu0 0
      %2458 = vmatprep.subr.bf16.mxu0 0
      %2459 = vmatpush2.bf16.msra.mxu0 0
      %2460 = vmatprep.subr.bf16.mxu0 0
      %2461 = vmatpush2.bf16.msra.mxu0 0
      %2462 = vmatprep.subr.bf16.mxu0 0
      %2463 = vmatpush2.bf16.msra.mxu0 0
      %2464 = vmatprep.subr.bf16.mxu0 0
      %2465 = vmatpush2.bf16.msra.mxu0 0
      %2466 = vmatprep.mubr.bf16.mxu0 0
      %2467 = vmatmul.mubr.bf16.gmra.mxu0 %v2432
      %v2468 = vpop.f32.mrf.mxu0
      %v2469 = vadd.f32 0.0, %v2468
      %v2470 = vpop.f32.mrf.mxu0
      %v2471 = vadd.f32 0.0, %v2470
      %v2472 = vpop.f32.mrf.mxu0
      %v2473 = vpop.f32.mrf.mxu0
      %2474 = vdwg.mxu0
      %2475 = vmatprep.subr.bf16.mxu0 0
      %2476 = vmatpush1.bf16.msra.mxu0 0
      %2477 = vmatprep.subr.bf16.mxu0 0
      %2478 = vmatpush1.bf16.msra.mxu0 0
      %2479 = vmatprep.subr.bf16.mxu0 0
      %2480 = vmatpush1.bf16.msra.mxu0 0
      %2481 = vmatprep.subr.bf16.mxu0 0
      %2482 = vmatpush1.bf16.msra.mxu0 0
      %2483 = vmatprep.subr.bf16.mxu0 0
      %2484 = vmatpush1.bf16.msra.mxu0 0
      %2485 = vmatprep.subr.bf16.mxu0 0
      %2486 = vmatpush1.bf16.msra.mxu0 0
      %2487 = vmatprep.subr.bf16.mxu0 0
      %2488 = vmatpush1.bf16.msra.mxu0 0
      %2489 = vmatprep.subr.bf16.mxu0 0
      %2490 = vmatpush1.bf16.msra.mxu0 %v856
      %2491 = vmatprep.subr.bf16.mxu0 0
      %2492 = vmatpush2.bf16.msra.mxu0 0
      %2493 = vmatprep.subr.bf16.mxu0 0
      %2494 = vmatpush2.bf16.msra.mxu0 0
      %2495 = vmatprep.subr.bf16.mxu0 0
      %2496 = vmatpush2.bf16.msra.mxu0 0
      %2497 = vmatprep.subr.bf16.mxu0 0
      %2498 = vmatpush2.bf16.msra.mxu0 0
      %2499 = vmatprep.subr.bf16.mxu0 0
      %2500 = vmatpush2.bf16.msra.mxu0 0
      %2501 = vmatprep.subr.bf16.mxu0 0
      %2502 = vmatpush2.bf16.msra.mxu0 0
      %2503 = vmatprep.subr.bf16.mxu0 0
      %2504 = vmatpush2.bf16.msra.mxu0 0
      %2505 = vmatprep.subr.bf16.mxu0 0
      %2506 = vmatpush2.bf16.msra.mxu0 0
      %2507 = vmatprep.mubr.bf16.mxu0 0
      %2508 = vmatmul.mubr.bf16.gmra.mxu0 %v2432
      %v2509 = vpop.f32.mrf.mxu0
      %v2510 = vadd.f32 0.0, %v2509
      %v2511 = vpop.f32.mrf.mxu0
      %v2512 = vpop.f32.mrf.mxu0
      %v2513 = vpop.f32.mrf.mxu0
      %2514 = vdwg.mxu0
      %v2515 = vld [vmem:[%s9] sm:$0xff]
      %2517 = vset.pattern.permute.xlu0 0
      %2518 = vperm.xlu0 %2517, %v2515
      %v2519 = vpop.permute.xlu0 %2518
      %v2521 = vmul.f32 %v2469, %v2519
      %v2522 = vmul.f32 %v2471, %v2519
      %v2523 = vmul.f32 %v2510, %v2519
      %v2524 = vld [vmem:[%s10] sm:$0xff]
      %2526 = vset.pattern.permute.xlu0 0
      %2527 = vperm.xlu0 %2526, %v2524
      %v2528 = vpop.permute.xlu0 %2527
      %v2530 = vadd.f32 %v2521, %v2528
      %v2531 = vadd.f32 %v2522, %v2528
      %v2532 = vadd.f32 %v2523, %v2528
      %v2533 = vadd.f32 %v2427, %v2530
      %v2534 = vadd.f32 %v2428, %v2531
      %v2535 = vadd.f32 %v2429, %v2532
      %v2536 = vmax.f32 %v2533, 0.0
      %v2537 = vmax.f32 %v2534, 0.0
      %v2538 = vmax.f32 %v2535, 0.0
      %2539 = vst [vmem:[%s386] sm:$0xff] %v2536
      %2540 = vst [vmem:[%s386 + $0x8] sm:$0xff] %v2537
      %vm2541 = vcmask 261120
      %2542 = vst.msk [vmem:[%s386 + $0x10] sm:$0xff] %vm2541, %v2538
      %p2543 = scmp.lt.s32.totalorder %s22, 1
      %s2544 = scalar_select %p2543, %s22, 1
      %s2545 = smul.addr %s2544, 3
      %s2546 = smul.addr %s2545, 8
      %s2547 = scalar_lea.vmem %s11, %s2546
      // Predicated region
      $region65: #{residual_block.1} parent=63 // pred_check
        %p2548 = pneg %p276
      $region66: #{residual_block.1} parent=63 // pred_check_branch
        %2550 = sbr.rel (%p2548) target = $region68
      $region67: #{residual_block.1} parent=63 // pred_region
        _
      $region68: #{residual_block.1} parent=63 // pred_fallthru
        _
    $region64: #{residual_block.1} parent=5 // pred_fallthru
      _
    %p2551 = scmp.le.s32.totalorder 2, %s17
    // Predicated region
    $region69: #{residual_block.1} parent=5 // pred_check
      %p2552 = pneg %p2551
    $region70: #{residual_block.1} parent=5 // pred_check_branch
      %2554 = sbr.rel (%p2552) target = $region72
    $region71: #{residual_block.1} parent=5 // pred_region
      %s2555 = ssub.s32 %s17, 2
      // Predicated region
      $region73: #{residual_block.1} parent=71 // pred_check
        %p2556 = pneg %p282
      $region74: #{residual_block.1} parent=71 // pred_check_branch
        %2558 = sbr.rel (%p2556) target = $region76
      $region75: #{residual_block.1} parent=71 // pred_region
        %p2559 = scmp.lt.s32.totalorder %s23, 1
        %s2560 = scalar_select %p2559, %s23, 1
        %s2561 = smul.addr %s2560, 3
        %s2562 = smul.addr %s2561, 8
        %s2563 = scalar_lea.vmem %s11, %s2562
      $region76: #{residual_block.1} parent=71 // pred_fallthru
        _
    $region72: #{residual_block.1} parent=5 // pred_fallthru
      _
  $region6: #{residual_block.1} parent=0 // loop_footer
    %s21 = sadd.s32 1, %s17
  $region7: #{residual_block.1} parent=0 // loop_footer_branch
    %16 = sbr.rel target = $region3
  $region8: #{residual_block.1} parent=0 // loop_exit
    _

</llo_original>
